<compile_context>
chip_gen: v6e
topology: v6e:2x2x1
jax: 0.10.0
libtpu: 0.0.40
codegen_flags: <defaults>
</compile_context>

<pallas_src>
import functools

import jax
import jax.numpy as jnp
from jax.experimental import pallas as pl
from jax.experimental.pallas import tpu as pltpu


# ----------------------------- slab layout ---------------------------------

LANES = 128          # lane width every slab piece is padded to
W_ROWS = 128         # sublane rows every weight piece is padded to
W_NAMES = ("conv_w", "tq_w", "tk_w", "tv_w", "head_pool", "head_unpool",
           "tout_w", "lin1_w", "lin2_w", "aq_w", "ak_w", "av_w", "cls_w")
BIAS_ROW = {"conv_b": 0, "tq_b": 1, "tk_b": 2, "tv_b": 3, "tout_b": 4,
            "lin1_b": 5, "lin2_b": 6, "n1_g": 7, "n1_b": 8, "n2_g": 9,
            "n2_b": 10, "aq_b": 11, "ak_b": 12, "av_b": 13, "cls_b": 14}
BIAS_ROWS = 16
SLAB_ROWS = len(W_NAMES) * W_ROWS + BIAS_ROWS


# ----------------------------- kernel ---------------------------------------


def style_classifier_kernel(x_ref, slab_ref, out_ref, *, hidden_dim, nhead):
    B, S, L = x_ref.shape           # L == LANES
    BS = B * S
    H = hidden_dim
    DH = H // nhead
    inv_h = 1.0 / H
    eps = 1e-5

    def weight(name):
        i = W_NAMES.index(name)
        return slab_ref[i * W_ROWS:(i + 1) * W_ROWS, :]          # [128, 128]

    bias_base = len(W_NAMES) * W_ROWS
    bias_blk = slab_ref[bias_base:bias_base + BIAS_ROWS, :]      # [16, 128]

    def bias(name):
        r = BIAS_ROW[name]
        return bias_blk[r:r + 1, :]                              # [1, 128]

    def mm(x2, wname, bname=None):
        y2 = jnp.dot(x2, weight(wname), preferred_element_type=jnp.float32)
        if bname is not None:
            y2 = y2 + bias(bname)
        return y2

    def layer_norm(z2, gname, bname):
        # Real channels occupy the first H lanes; the rest are exactly zero,
        # so lane sums divided by H give the correct moments (E[x^2] - mu^2).
        mu = jnp.sum(z2, axis=-1, keepdims=True) * inv_h
        ms = jnp.sum(z2 * z2, axis=-1, keepdims=True) * inv_h
        var = ms - mu * mu
        return bias(gname) * (z2 - mu) * jax.lax.rsqrt(var + eps) + bias(bname)

    # ---- Conv1d(k=3, padding=1) + folded BatchNorm + ReLU (im2col matmul) --
    x2 = x_ref[...].reshape(BS, L)
    y = jnp.maximum(mm(x2, "conv_w", "conv_b"), 0.0)             # [BS, L]

    # ---- TransformerEncoderLayer self-attention (8 heads, over axis 0) -----
    q = mm(y, "tq_w", "tq_b").reshape(B, S, L)
    k = mm(y, "tk_w", "tk_b").reshape(B, S, L)
    v = mm(y, "tv_w", "tv_b").reshape(B, S, L)

    pool = weight("head_pool")        # [L, L], real [H, nhead]
    unpool = weight("head_unpool")    # [L, L], real [nhead, H]
    scale_t = 1.0 / (DH ** 0.5)

    # scores_j[(i,s), h] = scale * sum_{d in head h} q[i,s,d] * k[j,s,d]
    scores = []
    for j in range(B):
        qk = (q * k[j][None]).reshape(BS, L)
        scores.append(
            jnp.dot(qk, pool, preferred_element_type=jnp.float32) * scale_t)
    m = functools.reduce(jnp.maximum, scores)
    p = [jnp.exp(sj - m) for sj in scores]
    denom = functools.reduce(jnp.add, p)
    inv_denom = pl.reciprocal(denom, approx=False)

    attn = None
    for j in range(B):
        # Broadcast each head's weight back across its DH lanes via the MXU.
        w_full = jnp.dot(p[j] * inv_denom, unpool,
                         preferred_element_type=jnp.float32).reshape(B, S, L)
        term = w_full * v[j][None]
        attn = term if attn is None else attn + term
    attn = mm(attn.reshape(BS, L), "tout_w", "tout_b")

    y = layer_norm(y + attn, "n1_g", "n1_b")
    ff = jnp.maximum(mm(y, "lin1_w", "lin1_b"), 0.0)
    ff = mm(ff, "lin2_w", "lin2_b")
    y = layer_norm(y + ff, "n2_g", "n2_b")

    # ---- MultiheadAttention(num_heads=1, batch_first=True) over sequence ---
    q2 = mm(y, "aq_w", "aq_b").reshape(B, S, L)
    k2 = mm(y, "ak_w", "ak_b").reshape(B, S, L)
    v2 = mm(y, "av_w", "av_b").reshape(B, S, L)
    s2 = jnp.einsum("bid,bjd->bij", q2, k2,
                    preferred_element_type=jnp.float32) * (1.0 / (H ** 0.5))
    m2 = jnp.max(s2, axis=-1, keepdims=True)
    p2 = jnp.exp(s2 - m2)
    p2 = p2 * pl.reciprocal(jnp.sum(p2, axis=-1, keepdims=True), approx=False)
    a2 = jnp.einsum("bij,bjd->bid", p2, v2, preferred_element_type=jnp.float32)

    # ---- mean over sequence, then fused (attn out_proj ∘ fc) Linear --------
    pooled = jnp.sum(a2, axis=1) * (1.0 / S)                     # [B, L]
    out_ref[...] = (jnp.dot(pooled, weight("cls_w"),
                            preferred_element_type=jnp.float32) + bias("cls_b"))


# ----------------------------- parameter packing (runs once) ----------------


def prepare_params(params, input_dim, hidden_dim, num_styles, nhead=8):
    """One-time host-side packing of all parameters into a single VMEM slab."""
    H, D, NS = hidden_dim, input_dim, num_styles
    DH = H // nhead
    eps = 1e-5
    assert H % nhead == 0 and 3 * D <= W_ROWS and 4 * H <= LANES and NS <= LANES

    def pad_w(a):
        a = jnp.asarray(a, jnp.float32)
        r, c = a.shape
        return jnp.pad(a, ((0, W_ROWS - r), (0, LANES - c)))

    def pad_b(vec):
        vec = jnp.asarray(vec, jnp.float32).reshape(-1)
        return jnp.pad(vec, (0, LANES - vec.shape[0]))

    # Fold eval-mode BatchNorm (running stats) into the conv weight / bias.
    gamma, beta, rmean, rvar = params["bn"]
    scale = gamma * jax.lax.rsqrt(rvar + eps)
    conv_w = params["conv_w"].reshape(3 * D, H) * scale
    conv_b = scale * (params["conv_b"].reshape(H) - rmean) + beta

    tq_w, tk_w, tv_w = params["t_qkv_w"]
    tq_b, tk_b, tv_b = params["t_qkv_b"]
    aq_w, ak_w, av_w = params["a_qkv_w"]
    aq_b, ak_b, av_b = params["a_qkv_b"]

    # Block-diagonal head-pool matrix (sums each head's DH lanes) + transpose.
    head_pool = (jnp.arange(H)[:, None] // DH
                 == jnp.arange(nhead)[None, :]).astype(jnp.float32)     # [H, NH]
    head_unpool = head_pool.T                                           # [NH, H]

    # Fold the single-head attention's out_proj into fc (pool-first is exact).
    cls_w = params["a_out_w"] @ params["fc_w"]                          # [H, NS]
    cls_b = params["a_out_b"] @ params["fc_w"] + params["fc_b"]         # [1, NS]

    weights = {
        "conv_w": conv_w, "tq_w": tq_w, "tk_w": tk_w, "tv_w": tv_w,
        "head_pool": head_pool, "head_unpool": head_unpool,
        "tout_w": params["t_out_w"], "lin1_w": params["t_lin1_w"],
        "lin2_w": params["t_lin2_w"],
        "aq_w": aq_w, "ak_w": ak_w, "av_w": av_w, "cls_w": cls_w,
    }
    biases = {
        "conv_b": conv_b, "tq_b": tq_b, "tk_b": tk_b, "tv_b": tv_b,
        "tout_b": params["t_out_b"], "lin1_b": params["t_lin1_b"],
        "lin2_b": params["t_lin2_b"],
        "n1_g": params["norm1"][0], "n1_b": params["norm1"][1],
        "n2_g": params["norm2"][0], "n2_b": params["norm2"][1],
        "aq_b": aq_b, "ak_b": ak_b, "av_b": av_b, "cls_b": cls_b,
    }

    w_slab = jnp.concatenate([pad_w(weights[n]) for n in W_NAMES], axis=0)
    bias_rows = [jnp.zeros((LANES,), jnp.float32)] * BIAS_ROWS
    for name, r in BIAS_ROW.items():
        bias_rows[r] = pad_b(biases[name])
    slab = jnp.concatenate([w_slab, jnp.stack(bias_rows, axis=0)], axis=0)
    assert slab.shape == (SLAB_ROWS, LANES)
    return jax.block_until_ready(slab)


# ----------------------------- forward wrapper ------------------------------


@functools.partial(jax.jit, static_argnames=("hidden_dim", "num_styles", "nhead"))
def style_classifier_forward(x, slab, *, hidden_dim, num_styles, nhead=8):
    """x: [B, S, input_dim] f32, slab from prepare_params -> [B, num_styles]."""
    B, S, D = x.shape
    # im2col for Conv1d(kernel=3, padding=1), channels last, padded to 128 lanes.
    # TODO(synk): could be built in-kernel with sublane shifts; negligible at D=12.
    x_pad = jnp.pad(x, ((0, 0), (1, 1), (0, 0)))
    x_col = jnp.concatenate(
        [x_pad[:, 0:S, :], x_pad[:, 1:S + 1, :], x_pad[:, 2:S + 2, :]], axis=-1)
    x_col = jnp.pad(x_col, ((0, 0), (0, 0), (0, LANES - 3 * D)))

    kernel = functools.partial(style_classifier_kernel,
                               hidden_dim=hidden_dim, nhead=nhead)
    vmem = pl.BlockSpec(memory_space=pltpu.MemorySpace.VMEM)
    out = pl.pallas_call(
        kernel,
        out_shape=jax.ShapeDtypeStruct((B, LANES), jnp.float32),
        in_specs=[vmem, vmem],
        out_specs=vmem,
    )(x_col, slab)
    return out[:, :num_styles]


# ----------------------------- synthetic params -----------------------------


def init_params(key, input_dim, hidden_dim, num_styles):
    """Deterministic synthetic parameters in kernel-ready ([in, out]) layout."""
    H, D, NS = hidden_dim, input_dim, num_styles
    ks = iter(jax.random.split(key, 32))

    def u(shape, scale):
        return (jax.random.uniform(next(ks), shape, jnp.float32) - 0.5) * 2.0 * scale

    p = {}
    p["conv_w"] = u((3, D, H), (1.0 / (3 * D)) ** 0.5)
    p["conv_b"] = u((1, H), 0.05)
    gamma = 1.0 + u((H,), 0.1)
    beta = u((H,), 0.1)
    rmean = u((H,), 0.1)
    rvar = 1.0 + jnp.abs(u((H,), 0.1))
    p["bn"] = jnp.stack([gamma, beta, rmean, rvar], axis=0)

    p["t_qkv_w"] = u((3, H, H), (1.0 / H) ** 0.5)
    p["t_qkv_b"] = u((3, H), 0.05)
    p["t_out_w"] = u((H, H), (1.0 / H) ** 0.5)
    p["t_out_b"] = u((1, H), 0.05)
    p["t_lin1_w"] = u((H, 4 * H), (1.0 / H) ** 0.5)
    p["t_lin1_b"] = u((1, 4 * H), 0.05)
    p["t_lin2_w"] = u((4 * H, H), (1.0 / (4 * H)) ** 0.5)
    p["t_lin2_b"] = u((1, H), 0.05)
    p["norm1"] = jnp.stack([1.0 + u((H,), 0.1), u((H,), 0.1)], axis=0)
    p["norm2"] = jnp.stack([1.0 + u((H,), 0.1), u((H,), 0.1)], axis=0)

    p["a_qkv_w"] = u((3, H, H), (1.0 / H) ** 0.5)
    p["a_qkv_b"] = u((3, H), 0.05)
    p["a_out_w"] = u((H, H), (1.0 / H) ** 0.5)
    p["a_out_b"] = u((1, H), 0.05)

    p["fc_w"] = u((H, NS), (1.0 / H) ** 0.5)
    p["fc_b"] = u((1, NS), 0.05)
    return p


if __name__ == "__main__":
    B, S = 2, 8
    INPUT_DIM = 12        # num_joints * 3  (4 joints)
    HIDDEN_DIM = 32       # divisible by nhead=8
    NUM_STYLES = 5

    key = jax.random.PRNGKey(0)
    kx, kp = jax.random.split(key)
    x = jax.random.normal(kx, (B, S, INPUT_DIM), dtype=jnp.float32)
    raw_params = init_params(kp, INPUT_DIM, HIDDEN_DIM, NUM_STYLES)
    slab = prepare_params(raw_params, INPUT_DIM, HIDDEN_DIM, NUM_STYLES)

    logits = style_classifier_forward(x, slab, hidden_dim=HIDDEN_DIM,
                                      num_styles=NUM_STYLES)
    logits = jax.block_until_ready(logits)
    assert logits.shape == (B, NUM_STYLES)
    assert bool(jnp.all(jnp.isfinite(logits)))
    print("KERNEL_OK")
</pallas_src>

<mosaic_0001>
module attributes {stable_mosaic.version = 11 : i64} {
  func.func @style_classifier_kernel(%arg0: memref<2x8x128xf32, #tpu.memory_space<vmem>>, %arg1: memref<1680x128xf32, #tpu.memory_space<vmem>>, %arg2: memref<2x128xf32, #tpu.memory_space<vmem>>) attributes {dimension_semantics = [], scalar_prefetch = 0 : i64, scratch_operands = 0 : i64, tpu.core_type = #tpu.core_type<tc>} {
    %c1664 = arith.constant 1664 : index
    %c0 = arith.constant 0 : index
    %0 = vector.load %arg1[%c1664, %c0] : memref<1680x128xf32, #tpu.memory_space<vmem>>, vector<16x128xf32>
    %c0_0 = arith.constant 0 : index
    %c0_1 = arith.constant 0 : index
    %c0_2 = arith.constant 0 : index
    %1 = vector.load %arg0[%c0_0, %c0_1, %c0_2] : memref<2x8x128xf32, #tpu.memory_space<vmem>>, vector<2x8x128xf32>
    %2 = vector.shape_cast %1 : vector<2x8x128xf32> to vector<16x128xf32>
    %c0_3 = arith.constant 0 : index
    %c0_4 = arith.constant 0 : index
    %3 = vector.load %arg1[%c0_3, %c0_4] : memref<1680x128xf32, #tpu.memory_space<vmem>>, vector<128x128xf32>
    %cst = arith.constant dense<0.000000e+00> : vector<16x128xf32>
    %4 = tpu.matmul %2, %3, %cst {dimension_numbers = #tpu.dot_dimension_numbers<[1], [0], [0], [1], [0, 0, 1, 1], [], []>} : vector<16x128xf32>, vector<128x128xf32>, vector<16x128xf32> -> vector<16x128xf32>
    %5 = vector.extract_strided_slice %0 {offsets = [0, 0], sizes = [1, 128], strides = [1, 1]} : vector<16x128xf32> to vector<1x128xf32>
    %6 = vector.broadcast %5 : vector<1x128xf32> to vector<16x128xf32>
    %7 = arith.addf %4, %6 : vector<16x128xf32>
    %cst_5 = arith.constant 0.000000e+00 : f32
    %8 = vector.broadcast %cst_5 : f32 to vector<16x128xf32>
    %9 = arith.maximumf %7, %8 : vector<16x128xf32>
    %c128 = arith.constant 128 : index
    %c0_6 = arith.constant 0 : index
    %10 = vector.load %arg1[%c128, %c0_6] : memref<1680x128xf32, #tpu.memory_space<vmem>>, vector<128x128xf32>
    %cst_7 = arith.constant dense<0.000000e+00> : vector<16x128xf32>
    %11 = tpu.matmul %9, %10, %cst_7 {dimension_numbers = #tpu.dot_dimension_numbers<[1], [0], [0], [1], [0, 0, 1, 1], [], []>} : vector<16x128xf32>, vector<128x128xf32>, vector<16x128xf32> -> vector<16x128xf32>
    %12 = vector.extract_strided_slice %0 {offsets = [1, 0], sizes = [1, 128], strides = [1, 1]} : vector<16x128xf32> to vector<1x128xf32>
    %13 = vector.broadcast %12 : vector<1x128xf32> to vector<16x128xf32>
    %14 = arith.addf %11, %13 : vector<16x128xf32>
    %15 = vector.shape_cast %14 : vector<16x128xf32> to vector<2x8x128xf32>
    %c256 = arith.constant 256 : index
    %c0_8 = arith.constant 0 : index
    %16 = vector.load %arg1[%c256, %c0_8] : memref<1680x128xf32, #tpu.memory_space<vmem>>, vector<128x128xf32>
    %cst_9 = arith.constant dense<0.000000e+00> : vector<16x128xf32>
    %17 = tpu.matmul %9, %16, %cst_9 {dimension_numbers = #tpu.dot_dimension_numbers<[1], [0], [0], [1], [0, 0, 1, 1], [], []>} : vector<16x128xf32>, vector<128x128xf32>, vector<16x128xf32> -> vector<16x128xf32>
    %18 = vector.extract_strided_slice %0 {offsets = [2, 0], sizes = [1, 128], strides = [1, 1]} : vector<16x128xf32> to vector<1x128xf32>
    %19 = vector.broadcast %18 : vector<1x128xf32> to vector<16x128xf32>
    %20 = arith.addf %17, %19 : vector<16x128xf32>
    %21 = vector.shape_cast %20 : vector<16x128xf32> to vector<2x8x128xf32>
    %c384 = arith.constant 384 : index
    %c0_10 = arith.constant 0 : index
    %22 = vector.load %arg1[%c384, %c0_10] : memref<1680x128xf32, #tpu.memory_space<vmem>>, vector<128x128xf32>
    %cst_11 = arith.constant dense<0.000000e+00> : vector<16x128xf32>
    %23 = tpu.matmul %9, %22, %cst_11 {dimension_numbers = #tpu.dot_dimension_numbers<[1], [0], [0], [1], [0, 0, 1, 1], [], []>} : vector<16x128xf32>, vector<128x128xf32>, vector<16x128xf32> -> vector<16x128xf32>
    %24 = vector.extract_strided_slice %0 {offsets = [3, 0], sizes = [1, 128], strides = [1, 1]} : vector<16x128xf32> to vector<1x128xf32>
    %25 = vector.broadcast %24 : vector<1x128xf32> to vector<16x128xf32>
    %26 = arith.addf %23, %25 : vector<16x128xf32>
    %27 = vector.shape_cast %26 : vector<16x128xf32> to vector<2x8x128xf32>
    %c512 = arith.constant 512 : index
    %c0_12 = arith.constant 0 : index
    %28 = vector.load %arg1[%c512, %c0_12] : memref<1680x128xf32, #tpu.memory_space<vmem>>, vector<128x128xf32>
    %c640 = arith.constant 640 : index
    %c0_13 = arith.constant 0 : index
    %29 = vector.load %arg1[%c640, %c0_13] : memref<1680x128xf32, #tpu.memory_space<vmem>>, vector<128x128xf32>
    %30 = vector.extract_strided_slice %21 {offsets = [0, 0, 0], sizes = [1, 8, 128], strides = [1, 1, 1]} : vector<2x8x128xf32> to vector<1x8x128xf32>
    %31 = vector.shape_cast %30 : vector<1x8x128xf32> to vector<8x128xf32>
    %32 = vector.shape_cast %31 : vector<8x128xf32> to vector<1x8x128xf32>
    %33 = vector.broadcast %32 : vector<1x8x128xf32> to vector<2x8x128xf32>
    %34 = arith.mulf %15, %33 : vector<2x8x128xf32>
    %35 = vector.shape_cast %34 : vector<2x8x128xf32> to vector<16x128xf32>
    %cst_14 = arith.constant dense<0.000000e+00> : vector<16x128xf32>
    %36 = tpu.matmul %35, %28, %cst_14 {dimension_numbers = #tpu.dot_dimension_numbers<[1], [0], [0], [1], [0, 0, 1, 1], [], []>} : vector<16x128xf32>, vector<128x128xf32>, vector<16x128xf32> -> vector<16x128xf32>
    %cst_15 = arith.constant 5.000000e-01 : f32
    %37 = vector.broadcast %cst_15 : f32 to vector<16x128xf32>
    %38 = arith.mulf %36, %37 : vector<16x128xf32>
    %39 = vector.extract_strided_slice %21 {offsets = [1, 0, 0], sizes = [1, 8, 128], strides = [1, 1, 1]} : vector<2x8x128xf32> to vector<1x8x128xf32>
    %40 = vector.shape_cast %39 : vector<1x8x128xf32> to vector<8x128xf32>
    %41 = vector.shape_cast %40 : vector<8x128xf32> to vector<1x8x128xf32>
    %42 = vector.broadcast %41 : vector<1x8x128xf32> to vector<2x8x128xf32>
    %43 = arith.mulf %15, %42 : vector<2x8x128xf32>
    %44 = vector.shape_cast %43 : vector<2x8x128xf32> to vector<16x128xf32>
    %cst_16 = arith.constant dense<0.000000e+00> : vector<16x128xf32>
    %45 = tpu.matmul %44, %28, %cst_16 {dimension_numbers = #tpu.dot_dimension_numbers<[1], [0], [0], [1], [0, 0, 1, 1], [], []>} : vector<16x128xf32>, vector<128x128xf32>, vector<16x128xf32> -> vector<16x128xf32>
    %cst_17 = arith.constant 5.000000e-01 : f32
    %46 = vector.broadcast %cst_17 : f32 to vector<16x128xf32>
    %47 = arith.mulf %45, %46 : vector<16x128xf32>
    %48 = arith.maximumf %38, %47 : vector<16x128xf32>
    %49 = arith.subf %38, %48 : vector<16x128xf32>
    %50 = math.exp %49 : vector<16x128xf32>
    %51 = arith.subf %47, %48 : vector<16x128xf32>
    %52 = math.exp %51 : vector<16x128xf32>
    %53 = arith.addf %50, %52 : vector<16x128xf32>
    %54 = tpu.reciprocal %53 : vector<16x128xf32> -> vector<16x128xf32>
    %55 = arith.mulf %50, %54 : vector<16x128xf32>
    %cst_18 = arith.constant dense<0.000000e+00> : vector<16x128xf32>
    %56 = tpu.matmul %55, %29, %cst_18 {dimension_numbers = #tpu.dot_dimension_numbers<[1], [0], [0], [1], [0, 0, 1, 1], [], []>} : vector<16x128xf32>, vector<128x128xf32>, vector<16x128xf32> -> vector<16x128xf32>
    %57 = vector.shape_cast %56 : vector<16x128xf32> to vector<2x8x128xf32>
    %58 = vector.extract_strided_slice %27 {offsets = [0, 0, 0], sizes = [1, 8, 128], strides = [1, 1, 1]} : vector<2x8x128xf32> to vector<1x8x128xf32>
    %59 = vector.shape_cast %58 : vector<1x8x128xf32> to vector<8x128xf32>
    %60 = vector.shape_cast %59 : vector<8x128xf32> to vector<1x8x128xf32>
    %61 = vector.broadcast %60 : vector<1x8x128xf32> to vector<2x8x128xf32>
    %62 = arith.mulf %57, %61 : vector<2x8x128xf32>
    %63 = arith.mulf %52, %54 : vector<16x128xf32>
    %cst_19 = arith.constant dense<0.000000e+00> : vector<16x128xf32>
    %64 = tpu.matmul %63, %29, %cst_19 {dimension_numbers = #tpu.dot_dimension_numbers<[1], [0], [0], [1], [0, 0, 1, 1], [], []>} : vector<16x128xf32>, vector<128x128xf32>, vector<16x128xf32> -> vector<16x128xf32>
    %65 = vector.shape_cast %64 : vector<16x128xf32> to vector<2x8x128xf32>
    %66 = vector.extract_strided_slice %27 {offsets = [1, 0, 0], sizes = [1, 8, 128], strides = [1, 1, 1]} : vector<2x8x128xf32> to vector<1x8x128xf32>
    %67 = vector.shape_cast %66 : vector<1x8x128xf32> to vector<8x128xf32>
    %68 = vector.shape_cast %67 : vector<8x128xf32> to vector<1x8x128xf32>
    %69 = vector.broadcast %68 : vector<1x8x128xf32> to vector<2x8x128xf32>
    %70 = arith.mulf %65, %69 : vector<2x8x128xf32>
    %71 = arith.addf %62, %70 : vector<2x8x128xf32>
    %72 = vector.shape_cast %71 : vector<2x8x128xf32> to vector<16x128xf32>
    %c768 = arith.constant 768 : index
    %c0_20 = arith.constant 0 : index
    %73 = vector.load %arg1[%c768, %c0_20] : memref<1680x128xf32, #tpu.memory_space<vmem>>, vector<128x128xf32>
    %cst_21 = arith.constant dense<0.000000e+00> : vector<16x128xf32>
    %74 = tpu.matmul %72, %73, %cst_21 {dimension_numbers = #tpu.dot_dimension_numbers<[1], [0], [0], [1], [0, 0, 1, 1], [], []>} : vector<16x128xf32>, vector<128x128xf32>, vector<16x128xf32> -> vector<16x128xf32>
    %75 = vector.extract_strided_slice %0 {offsets = [4, 0], sizes = [1, 128], strides = [1, 1]} : vector<16x128xf32> to vector<1x128xf32>
    %76 = vector.broadcast %75 : vector<1x128xf32> to vector<16x128xf32>
    %77 = arith.addf %74, %76 : vector<16x128xf32>
    %78 = arith.addf %9, %77 : vector<16x128xf32>
    %cst_22 = arith.constant dense<0.000000e+00> : vector<16xf32>
    %79 = vector.multi_reduction <add>, %78, %cst_22 [1] : vector<16x128xf32> to vector<16xf32>
    %80 = vector.shape_cast %79 : vector<16xf32> to vector<16x1xf32>
    %cst_23 = arith.constant 3.125000e-02 : f32
    %81 = vector.broadcast %cst_23 : f32 to vector<16x1xf32>
    %82 = arith.mulf %80, %81 : vector<16x1xf32>
    %83 = arith.mulf %78, %78 : vector<16x128xf32>
    %cst_24 = arith.constant dense<0.000000e+00> : vector<16xf32>
    %84 = vector.multi_reduction <add>, %83, %cst_24 [1] : vector<16x128xf32> to vector<16xf32>
    %85 = vector.shape_cast %84 : vector<16xf32> to vector<16x1xf32>
    %cst_25 = arith.constant 3.125000e-02 : f32
    %86 = vector.broadcast %cst_25 : f32 to vector<16x1xf32>
    %87 = arith.mulf %85, %86 : vector<16x1xf32>
    %88 = arith.mulf %82, %82 : vector<16x1xf32>
    %89 = arith.subf %87, %88 : vector<16x1xf32>
    %90 = vector.extract_strided_slice %0 {offsets = [7, 0], sizes = [1, 128], strides = [1, 1]} : vector<16x128xf32> to vector<1x128xf32>
    %91 = vector.broadcast %82 : vector<16x1xf32> to vector<16x128xf32>
    %92 = arith.subf %78, %91 : vector<16x128xf32>
    %93 = vector.broadcast %90 : vector<1x128xf32> to vector<16x128xf32>
    %94 = arith.mulf %93, %92 : vector<16x128xf32>
    %cst_26 = arith.constant 9.99999974E-6 : f32
    %95 = vector.broadcast %cst_26 : f32 to vector<16x1xf32>
    %96 = arith.addf %89, %95 : vector<16x1xf32>
    %97 = math.rsqrt %96 : vector<16x1xf32>
    %98 = vector.broadcast %97 : vector<16x1xf32> to vector<16x128xf32>
    %99 = arith.mulf %94, %98 : vector<16x128xf32>
    %100 = vector.extract_strided_slice %0 {offsets = [8, 0], sizes = [1, 128], strides = [1, 1]} : vector<16x128xf32> to vector<1x128xf32>
    %101 = vector.broadcast %100 : vector<1x128xf32> to vector<16x128xf32>
    %102 = arith.addf %99, %101 : vector<16x128xf32>
    %c896 = arith.constant 896 : index
    %c0_27 = arith.constant 0 : index
    %103 = vector.load %arg1[%c896, %c0_27] : memref<1680x128xf32, #tpu.memory_space<vmem>>, vector<128x128xf32>
    %cst_28 = arith.constant dense<0.000000e+00> : vector<16x128xf32>
    %104 = tpu.matmul %102, %103, %cst_28 {dimension_numbers = #tpu.dot_dimension_numbers<[1], [0], [0], [1], [0, 0, 1, 1], [], []>} : vector<16x128xf32>, vector<128x128xf32>, vector<16x128xf32> -> vector<16x128xf32>
    %105 = vector.extract_strided_slice %0 {offsets = [5, 0], sizes = [1, 128], strides = [1, 1]} : vector<16x128xf32> to vector<1x128xf32>
    %106 = vector.broadcast %105 : vector<1x128xf32> to vector<16x128xf32>
    %107 = arith.addf %104, %106 : vector<16x128xf32>
    %cst_29 = arith.constant 0.000000e+00 : f32
    %108 = vector.broadcast %cst_29 : f32 to vector<16x128xf32>
    %109 = arith.maximumf %107, %108 : vector<16x128xf32>
    %c1024 = arith.constant 1024 : index
    %c0_30 = arith.constant 0 : index
    %110 = vector.load %arg1[%c1024, %c0_30] : memref<1680x128xf32, #tpu.memory_space<vmem>>, vector<128x128xf32>
    %cst_31 = arith.constant dense<0.000000e+00> : vector<16x128xf32>
    %111 = tpu.matmul %109, %110, %cst_31 {dimension_numbers = #tpu.dot_dimension_numbers<[1], [0], [0], [1], [0, 0, 1, 1], [], []>} : vector<16x128xf32>, vector<128x128xf32>, vector<16x128xf32> -> vector<16x128xf32>
    %112 = vector.extract_strided_slice %0 {offsets = [6, 0], sizes = [1, 128], strides = [1, 1]} : vector<16x128xf32> to vector<1x128xf32>
    %113 = vector.broadcast %112 : vector<1x128xf32> to vector<16x128xf32>
    %114 = arith.addf %111, %113 : vector<16x128xf32>
    %115 = arith.addf %102, %114 : vector<16x128xf32>
    %cst_32 = arith.constant dense<0.000000e+00> : vector<16xf32>
    %116 = vector.multi_reduction <add>, %115, %cst_32 [1] : vector<16x128xf32> to vector<16xf32>
    %117 = vector.shape_cast %116 : vector<16xf32> to vector<16x1xf32>
    %cst_33 = arith.constant 3.125000e-02 : f32
    %118 = vector.broadcast %cst_33 : f32 to vector<16x1xf32>
    %119 = arith.mulf %117, %118 : vector<16x1xf32>
    %120 = arith.mulf %115, %115 : vector<16x128xf32>
    %cst_34 = arith.constant dense<0.000000e+00> : vector<16xf32>
    %121 = vector.multi_reduction <add>, %120, %cst_34 [1] : vector<16x128xf32> to vector<16xf32>
    %122 = vector.shape_cast %121 : vector<16xf32> to vector<16x1xf32>
    %cst_35 = arith.constant 3.125000e-02 : f32
    %123 = vector.broadcast %cst_35 : f32 to vector<16x1xf32>
    %124 = arith.mulf %122, %123 : vector<16x1xf32>
    %125 = arith.mulf %119, %119 : vector<16x1xf32>
    %126 = arith.subf %124, %125 : vector<16x1xf32>
    %127 = vector.extract_strided_slice %0 {offsets = [9, 0], sizes = [1, 128], strides = [1, 1]} : vector<16x128xf32> to vector<1x128xf32>
    %128 = vector.broadcast %119 : vector<16x1xf32> to vector<16x128xf32>
    %129 = arith.subf %115, %128 : vector<16x128xf32>
    %130 = vector.broadcast %127 : vector<1x128xf32> to vector<16x128xf32>
    %131 = arith.mulf %130, %129 : vector<16x128xf32>
    %cst_36 = arith.constant 9.99999974E-6 : f32
    %132 = vector.broadcast %cst_36 : f32 to vector<16x1xf32>
    %133 = arith.addf %126, %132 : vector<16x1xf32>
    %134 = math.rsqrt %133 : vector<16x1xf32>
    %135 = vector.broadcast %134 : vector<16x1xf32> to vector<16x128xf32>
    %136 = arith.mulf %131, %135 : vector<16x128xf32>
    %137 = vector.extract_strided_slice %0 {offsets = [10, 0], sizes = [1, 128], strides = [1, 1]} : vector<16x128xf32> to vector<1x128xf32>
    %138 = vector.broadcast %137 : vector<1x128xf32> to vector<16x128xf32>
    %139 = arith.addf %136, %138 : vector<16x128xf32>
    %c1152 = arith.constant 1152 : index
    %c0_37 = arith.constant 0 : index
    %140 = vector.load %arg1[%c1152, %c0_37] : memref<1680x128xf32, #tpu.memory_space<vmem>>, vector<128x128xf32>
    %cst_38 = arith.constant dense<0.000000e+00> : vector<16x128xf32>
    %141 = tpu.matmul %139, %140, %cst_38 {dimension_numbers = #tpu.dot_dimension_numbers<[1], [0], [0], [1], [0, 0, 1, 1], [], []>} : vector<16x128xf32>, vector<128x128xf32>, vector<16x128xf32> -> vector<16x128xf32>
    %142 = vector.extract_strided_slice %0 {offsets = [11, 0], sizes = [1, 128], strides = [1, 1]} : vector<16x128xf32> to vector<1x128xf32>
    %143 = vector.broadcast %142 : vector<1x128xf32> to vector<16x128xf32>
    %144 = arith.addf %141, %143 : vector<16x128xf32>
    %145 = vector.shape_cast %144 : vector<16x128xf32> to vector<2x8x128xf32>
    %c1280 = arith.constant 1280 : index
    %c0_39 = arith.constant 0 : index
    %146 = vector.load %arg1[%c1280, %c0_39] : memref<1680x128xf32, #tpu.memory_space<vmem>>, vector<128x128xf32>
    %cst_40 = arith.constant dense<0.000000e+00> : vector<16x128xf32>
    %147 = tpu.matmul %139, %146, %cst_40 {dimension_numbers = #tpu.dot_dimension_numbers<[1], [0], [0], [1], [0, 0, 1, 1], [], []>} : vector<16x128xf32>, vector<128x128xf32>, vector<16x128xf32> -> vector<16x128xf32>
    %148 = vector.extract_strided_slice %0 {offsets = [12, 0], sizes = [1, 128], strides = [1, 1]} : vector<16x128xf32> to vector<1x128xf32>
    %149 = vector.broadcast %148 : vector<1x128xf32> to vector<16x128xf32>
    %150 = arith.addf %147, %149 : vector<16x128xf32>
    %151 = vector.shape_cast %150 : vector<16x128xf32> to vector<2x8x128xf32>
    %c1408 = arith.constant 1408 : index
    %c0_41 = arith.constant 0 : index
    %152 = vector.load %arg1[%c1408, %c0_41] : memref<1680x128xf32, #tpu.memory_space<vmem>>, vector<128x128xf32>
    %cst_42 = arith.constant dense<0.000000e+00> : vector<16x128xf32>
    %153 = tpu.matmul %139, %152, %cst_42 {dimension_numbers = #tpu.dot_dimension_numbers<[1], [0], [0], [1], [0, 0, 1, 1], [], []>} : vector<16x128xf32>, vector<128x128xf32>, vector<16x128xf32> -> vector<16x128xf32>
    %154 = vector.extract_strided_slice %0 {offsets = [13, 0], sizes = [1, 128], strides = [1, 1]} : vector<16x128xf32> to vector<1x128xf32>
    %155 = vector.broadcast %154 : vector<1x128xf32> to vector<16x128xf32>
    %156 = arith.addf %153, %155 : vector<16x128xf32>
    %157 = vector.shape_cast %156 : vector<16x128xf32> to vector<2x8x128xf32>
    "tpu.trace_start"() <{level = 10 : i32, message = "bid,bjd->bij"}> : () -> ()
    %cst_43 = arith.constant dense<0.000000e+00> : vector<2x8x8xf32>
    %158 = tpu.matmul %145, %151, %cst_43 {dimension_numbers = #tpu.dot_dimension_numbers<[2], [2], [1], [1], [0, 0, 0, 1, 1, 1], [0], [0]>} : vector<2x8x128xf32>, vector<2x8x128xf32>, vector<2x8x8xf32> -> vector<2x8x8xf32>
    "tpu.trace_stop"() : () -> ()
    %cst_44 = arith.constant 0.176776692 : f32
    %159 = vector.broadcast %cst_44 : f32 to vector<2x8x8xf32>
    %160 = arith.mulf %158, %159 : vector<2x8x8xf32>
    %cst_45 = arith.constant dense<0xFF800000> : vector<2x8xf32>
    %161 = vector.multi_reduction <maximumf>, %160, %cst_45 [2] : vector<2x8x8xf32> to vector<2x8xf32>
    %162 = vector.shape_cast %161 : vector<2x8xf32> to vector<2x8x1xf32>
    %163 = vector.broadcast %162 : vector<2x8x1xf32> to vector<2x8x8xf32>
    %164 = arith.subf %160, %163 : vector<2x8x8xf32>
    %165 = math.exp %164 : vector<2x8x8xf32>
    %cst_46 = arith.constant dense<0.000000e+00> : vector<2x8xf32>
    %166 = vector.multi_reduction <add>, %165, %cst_46 [2] : vector<2x8x8xf32> to vector<2x8xf32>
    %167 = vector.shape_cast %166 : vector<2x8xf32> to vector<2x8x1xf32>
    %168 = tpu.reciprocal %167 : vector<2x8x1xf32> -> vector<2x8x1xf32>
    %169 = vector.broadcast %168 : vector<2x8x1xf32> to vector<2x8x8xf32>
    %170 = arith.mulf %165, %169 : vector<2x8x8xf32>
    "tpu.trace_start"() <{level = 10 : i32, message = "bij,bjd->bid"}> : () -> ()
    %cst_47 = arith.constant dense<0.000000e+00> : vector<2x8x128xf32>
    %171 = tpu.matmul %170, %157, %cst_47 {dimension_numbers = #tpu.dot_dimension_numbers<[2], [1], [1], [2], [0, 0, 0, 1, 1, 2], [0], [0]>} : vector<2x8x8xf32>, vector<2x8x128xf32>, vector<2x8x128xf32> -> vector<2x8x128xf32>
    "tpu.trace_stop"() : () -> ()
    %cst_48 = arith.constant dense<0.000000e+00> : vector<2x128xf32>
    %172 = vector.multi_reduction <add>, %171, %cst_48 [1] : vector<2x8x128xf32> to vector<2x128xf32>
    %cst_49 = arith.constant 1.250000e-01 : f32
    %173 = vector.broadcast %cst_49 : f32 to vector<2x128xf32>
    %174 = arith.mulf %172, %173 : vector<2x128xf32>
    %c1536 = arith.constant 1536 : index
    %c0_50 = arith.constant 0 : index
    %175 = vector.load %arg1[%c1536, %c0_50] : memref<1680x128xf32, #tpu.memory_space<vmem>>, vector<128x128xf32>
    %cst_51 = arith.constant dense<0.000000e+00> : vector<2x128xf32>
    %176 = tpu.matmul %174, %175, %cst_51 {dimension_numbers = #tpu.dot_dimension_numbers<[1], [0], [0], [1], [0, 0, 1, 1], [], []>} : vector<2x128xf32>, vector<128x128xf32>, vector<2x128xf32> -> vector<2x128xf32>
    %177 = vector.extract_strided_slice %0 {offsets = [14, 0], sizes = [1, 128], strides = [1, 1]} : vector<16x128xf32> to vector<1x128xf32>
    %178 = vector.broadcast %177 : vector<1x128xf32> to vector<2x128xf32>
    %179 = arith.addf %176, %178 : vector<2x128xf32>
    %c0_52 = arith.constant 0 : index
    %c0_53 = arith.constant 0 : index
    %180 = vector.load %arg2[%c0_52, %c0_53] : memref<2x128xf32, #tpu.memory_space<vmem>>, vector<2x128xf32>
    tpu.vector_store %arg2[%c0_52, %c0_53], %179 {strides = array<i32>} : memref<2x128xf32, #tpu.memory_space<vmem>>, vector<2x128xf32>,
    return
  }
}

</mosaic_0001>

<llo_original>
// kernel: style_classifier_forward.1
$region0: #{style_classifier_forward.1}
  #allocation0 [shape = 'u32[]', space=smem, size = 0x4, offset = 0x4, fixed_abs, tag = 'smem constant byte address 0x4 - core index']
  #allocation1 [shape = 'u32[144,128]{1,0:T(1,128)}', space=vmem, size = 0x12000, scoped, tag = 'internal scratch']
  %s0 = inlined_call_operand.vmem [shape: f32[2,8,128], index: 0, kind: input, shape index: {}]
  %s1 = inlined_call_operand.hbm [shape: f32[1680,128], index: 1, kind: input, shape index: {}]
  %s2 = inlined_call_operand.hbm [shape: f32[2,128], index: 2, kind: output, shape index: {}]
  %s3 = sld [smem:[#allocation0]]
  $region22: #{style_classifier_forward.1} parent=0
    _
  %s5 = ssub.s32 1, %s3
  %s6 = scalar_select 0, %s5, %s3
  $region1: #{style_classifier_forward.1} parent=0
    #allocation2 [shape = 'u8[860160]{0}', space=vmem, size = 0xd2000, scoped, tag = 'input window, operand 1, single buffered']
    #allocation3 [shape = 's32[1]{0}', space=sflag, size = 0x4, scoped, tag = 'scoped memory for style_classifier_forward.1']
    #allocation4 [shape = 's32[1]{0}', space=sflag, size = 0x4, scoped, tag = 'scoped memory for style_classifier_forward.1']
    #allocation5 [shape = 'u8[1024]{0}', space=vmem, size = 0x400, scoped, tag = 'output window, operand 0, single buffered']
    %7 = vsyncpa [#allocation3], 0
    %8 = vsyncpa [#allocation4], 0
    // Predicated region
    $region2: #{style_classifier_forward.1} parent=1 // pred_check
      _
    $region3: #{style_classifier_forward.1} parent=1 // pred_check_branch
      %10 = sbr.rel (0) target = $region5
    $region4: #{style_classifier_forward.1} parent=1 // pred_region
      _
    $region5: #{style_classifier_forward.1} parent=1 // pred_fallthru
      _
    // Predicated region
    $region6: #{style_classifier_forward.1} parent=1 // pred_check
      _
    $region7: #{style_classifier_forward.1} parent=1 // pred_check_branch
      %12 = sbr.rel (0) target = $region9
    $region8: #{style_classifier_forward.1} parent=1 // pred_region
      %s14 = ssub.s32 26880, 26880
      %15 = vsyncadd [#allocation3], %s14
      %s16 = sshll.u32 [#allocation2], 4
      %s17 = int_to_ptr.vmem [resolvable:$true] %s16
      %22 = dma.hbm_to_vmem [thread:$0]  %s1, 26880, %s17, [#allocation3], 128, 128, 8
    $region9: #{style_classifier_forward.1} parent=1 // pred_fallthru
      _
    // Predicated region
    $region10: #{style_classifier_forward.1} parent=1 // pred_check
      _
    $region11: #{style_classifier_forward.1} parent=1 // pred_check_branch
      %24 = sbr.rel (0) target = $region13
    $region12: #{style_classifier_forward.1} parent=1 // pred_region
      %25 = dma.done [#allocation3], 26880
    $region13: #{style_classifier_forward.1} parent=1 // pred_fallthru
      _
    %v26 = vld [vmem:[#allocation2 + $0x680] sm:$0xff]
    %v27 = vld [vmem:[#allocation2 + $0x688] sm:$0xff]
    %v28 = vld [vmem:[%s0] sm:$0xff]
    %v29 = vld [vmem:[%s0 + $0x8] sm:$0xff]
    %v30 = vld [vmem:[#allocation2] sm:$0xff]
    %v31 = vld [vmem:[#allocation2 + $0x8] sm:$0xff]
    %v32 = vld [vmem:[#allocation2 + $0x10] sm:$0xff]
    %v33 = vld [vmem:[#allocation2 + $0x18] sm:$0xff]
    %v34 = vld [vmem:[#allocation2 + $0x20] sm:$0xff]
    %v35 = vld [vmem:[#allocation2 + $0x28] sm:$0xff]
    %v36 = vld [vmem:[#allocation2 + $0x30] sm:$0xff]
    %v37 = vld [vmem:[#allocation2 + $0x38] sm:$0xff]
    %v38 = vld [vmem:[#allocation2 + $0x40] sm:$0xff]
    %v39 = vld [vmem:[#allocation2 + $0x48] sm:$0xff]
    %v40 = vld [vmem:[#allocation2 + $0x50] sm:$0xff]
    %v41 = vld [vmem:[#allocation2 + $0x58] sm:$0xff]
    %v42 = vld [vmem:[#allocation2 + $0x60] sm:$0xff]
    %v43 = vld [vmem:[#allocation2 + $0x68] sm:$0xff]
    %v44 = vld [vmem:[#allocation2 + $0x70] sm:$0xff]
    %v45 = vld [vmem:[#allocation2 + $0x78] sm:$0xff]
    %v46 = vlaneseq
    %v47 = vshrl.u32 %v46, 7
    %v48 = vsub.s32 0, %v47
    %v49 = vrot.slane %v26, %v48
    %50 = vmatprep.subr.mxu0 0.0
    %51 = vmatpush1.msra.mxu0 %v45
    %52 = vmatprep.subr.mxu0 0.0
    %53 = vmatpush1.msra.mxu0 %v44
    %54 = vmatprep.subr.mxu0 0.0
    %55 = vmatpush1.msra.mxu0 %v43
    %56 = vmatprep.subr.mxu0 0.0
    %57 = vmatpush1.msra.mxu0 %v42
    %58 = vmatprep.subr.mxu0 0.0
    %59 = vmatpush1.msra.mxu0 %v41
    %60 = vmatprep.subr.mxu0 0.0
    %61 = vmatpush1.msra.mxu0 %v40
    %62 = vmatprep.subr.mxu0 0.0
    %63 = vmatpush1.msra.mxu0 %v39
    %64 = vmatprep.subr.mxu0 0.0
    %65 = vmatpush1.msra.mxu0 %v38
    %66 = vmatprep.subr.mxu0 0.0
    %67 = vmatpush1.msra.mxu0 %v37
    %68 = vmatprep.subr.mxu0 0.0
    %69 = vmatpush1.msra.mxu0 %v36
    %70 = vmatprep.subr.mxu0 0.0
    %71 = vmatpush1.msra.mxu0 %v35
    %72 = vmatprep.subr.mxu0 0.0
    %73 = vmatpush1.msra.mxu0 %v34
    %74 = vmatprep.subr.mxu0 0.0
    %75 = vmatpush1.msra.mxu0 %v33
    %76 = vmatprep.subr.mxu0 0.0
    %77 = vmatpush1.msra.mxu0 %v32
    %78 = vmatprep.subr.mxu0 0.0
    %79 = vmatpush1.msra.mxu0 %v31
    %80 = vmatprep.subr.mxu0 0.0
    %81 = vmatpush1.msra.mxu0 %v30
    %82 = vmatprep.subr.mxu0 0.0
    %83 = vmatpush2.msra.mxu0 0.0
    %84 = vmatprep.subr.mxu0 0.0
    %85 = vmatpush2.msra.mxu0 0.0
    %86 = vmatprep.subr.mxu0 0.0
    %87 = vmatpush2.msra.mxu0 0.0
    %88 = vmatprep.subr.mxu0 0.0
    %89 = vmatpush2.msra.mxu0 0.0
    %90 = vmatprep.subr.mxu0 0.0
    %91 = vmatpush2.msra.mxu0 0.0
    %92 = vmatprep.subr.mxu0 0.0
    %93 = vmatpush2.msra.mxu0 0.0
    %94 = vmatprep.subr.mxu0 0.0
    %95 = vmatpush2.msra.mxu0 0.0
    %96 = vmatprep.subr.mxu0 0.0
    %97 = vmatpush2.msra.mxu0 0.0
    %98 = vmatprep.subr.mxu0 0.0
    %99 = vmatpush2.msra.mxu0 0.0
    %100 = vmatprep.subr.mxu0 0.0
    %101 = vmatpush2.msra.mxu0 0.0
    %102 = vmatprep.subr.mxu0 0.0
    %103 = vmatpush2.msra.mxu0 0.0
    %104 = vmatprep.subr.mxu0 0.0
    %105 = vmatpush2.msra.mxu0 0.0
    %106 = vmatprep.subr.mxu0 0.0
    %107 = vmatpush2.msra.mxu0 0.0
    %108 = vmatprep.subr.mxu0 0.0
    %109 = vmatpush2.msra.mxu0 0.0
    %110 = vmatprep.subr.mxu0 0.0
    %111 = vmatpush2.msra.mxu0 0.0
    %112 = vmatprep.subr.mxu0 0.0
    %113 = vmatpush2.msra.mxu0 0.0
    %114 = vmatprep.mubr.f32.mxu0 0.0
    %115 = vmatmul.mubr.f32.gmra.mxu0 %v28
    %v116 = vpop.f32.mrf.mxu0
    %v117 = vadd.f32 %v49, %v116
    %v118 = vpop.f32.mrf.mxu0
    %119 = vmatprep.mubr.f32.mxu0 0.0
    %120 = vmatmul.mubr.f32.gmra.mxu0 %v29
    %v121 = vpop.f32.mrf.mxu0
    %v122 = vadd.f32 %v49, %v121
    %v123 = vpop.f32.mrf.mxu0
    %124 = vdwg.mxu0
    %v125 = vmax.f32 %v117, 0.0
    %v126 = vmax.f32 %v122, 0.0
    %v127 = vld [vmem:[#allocation2 + $0x80] sm:$0xff]
    %v128 = vld [vmem:[#allocation2 + $0x88] sm:$0xff]
    %v129 = vld [vmem:[#allocation2 + $0x90] sm:$0xff]
    %v130 = vld [vmem:[#allocation2 + $0x98] sm:$0xff]
    %v131 = vld [vmem:[#allocation2 + $0xa0] sm:$0xff]
    %v132 = vld [vmem:[#allocation2 + $0xa8] sm:$0xff]
    %v133 = vld [vmem:[#allocation2 + $0xb0] sm:$0xff]
    %v134 = vld [vmem:[#allocation2 + $0xb8] sm:$0xff]
    %v135 = vld [vmem:[#allocation2 + $0xc0] sm:$0xff]
    %v136 = vld [vmem:[#allocation2 + $0xc8] sm:$0xff]
    %v137 = vld [vmem:[#allocation2 + $0xd0] sm:$0xff]
    %v138 = vld [vmem:[#allocation2 + $0xd8] sm:$0xff]
    %v139 = vld [vmem:[#allocation2 + $0xe0] sm:$0xff]
    %v140 = vld [vmem:[#allocation2 + $0xe8] sm:$0xff]
    %v141 = vld [vmem:[#allocation2 + $0xf0] sm:$0xff]
    %v142 = vld [vmem:[#allocation2 + $0xf8] sm:$0xff]
    %v143 = vlaneseq
    %v144 = vshrl.u32 %v143, 7
    %v145 = vsub.s32 1, %v144
    %v146 = vrot.slane %v26, %v145
    %147 = vmatprep.subr.mxu0 0.0
    %148 = vmatpush1.msra.mxu0 %v142
    %149 = vmatprep.subr.mxu0 0.0
    %150 = vmatpush1.msra.mxu0 %v141
    %151 = vmatprep.subr.mxu0 0.0
    %152 = vmatpush1.msra.mxu0 %v140
    %153 = vmatprep.subr.mxu0 0.0
    %154 = vmatpush1.msra.mxu0 %v139
    %155 = vmatprep.subr.mxu0 0.0
    %156 = vmatpush1.msra.mxu0 %v138
    %157 = vmatprep.subr.mxu0 0.0
    %158 = vmatpush1.msra.mxu0 %v137
    %159 = vmatprep.subr.mxu0 0.0
    %160 = vmatpush1.msra.mxu0 %v136
    %161 = vmatprep.subr.mxu0 0.0
    %162 = vmatpush1.msra.mxu0 %v135
    %163 = vmatprep.subr.mxu0 0.0
    %164 = vmatpush1.msra.mxu0 %v134
    %165 = vmatprep.subr.mxu0 0.0
    %166 = vmatpush1.msra.mxu0 %v133
    %167 = vmatprep.subr.mxu0 0.0
    %168 = vmatpush1.msra.mxu0 %v132
    %169 = vmatprep.subr.mxu0 0.0
    %170 = vmatpush1.msra.mxu0 %v131
    %171 = vmatprep.subr.mxu0 0.0
    %172 = vmatpush1.msra.mxu0 %v130
    %173 = vmatprep.subr.mxu0 0.0
    %174 = vmatpush1.msra.mxu0 %v129
    %175 = vmatprep.subr.mxu0 0.0
    %176 = vmatpush1.msra.mxu0 %v128
    %177 = vmatprep.subr.mxu0 0.0
    %178 = vmatpush1.msra.mxu0 %v127
    %179 = vmatprep.subr.mxu0 0.0
    %180 = vmatpush2.msra.mxu0 0.0
    %181 = vmatprep.subr.mxu0 0.0
    %182 = vmatpush2.msra.mxu0 0.0
    %183 = vmatprep.subr.mxu0 0.0
    %184 = vmatpush2.msra.mxu0 0.0
    %185 = vmatprep.subr.mxu0 0.0
    %186 = vmatpush2.msra.mxu0 0.0
    %187 = vmatprep.subr.mxu0 0.0
    %188 = vmatpush2.msra.mxu0 0.0
    %189 = vmatprep.subr.mxu0 0.0
    %190 = vmatpush2.msra.mxu0 0.0
    %191 = vmatprep.subr.mxu0 0.0
    %192 = vmatpush2.msra.mxu0 0.0
    %193 = vmatprep.subr.mxu0 0.0
    %194 = vmatpush2.msra.mxu0 0.0
    %195 = vmatprep.subr.mxu0 0.0
    %196 = vmatpush2.msra.mxu0 0.0
    %197 = vmatprep.subr.mxu0 0.0
    %198 = vmatpush2.msra.mxu0 0.0
    %199 = vmatprep.subr.mxu0 0.0
    %200 = vmatpush2.msra.mxu0 0.0
    %201 = vmatprep.subr.mxu0 0.0
    %202 = vmatpush2.msra.mxu0 0.0
    %203 = vmatprep.subr.mxu0 0.0
    %204 = vmatpush2.msra.mxu0 0.0
    %205 = vmatprep.subr.mxu0 0.0
    %206 = vmatpush2.msra.mxu0 0.0
    %207 = vmatprep.subr.mxu0 0.0
    %208 = vmatpush2.msra.mxu0 0.0
    %209 = vmatprep.subr.mxu0 0.0
    %210 = vmatpush2.msra.mxu0 0.0
    %211 = vmatprep.mubr.f32.mxu0 0.0
    %212 = vmatmul.mubr.f32.gmra.mxu0 %v125
    %v213 = vpop.f32.mrf.mxu0
    %v214 = vadd.f32 %v146, %v213
    %v215 = vpop.f32.mrf.mxu0
    %216 = vmatprep.mubr.f32.mxu0 0.0
    %217 = vmatmul.mubr.f32.gmra.mxu0 %v126
    %v218 = vpop.f32.mrf.mxu0
    %v219 = vadd.f32 %v146, %v218
    %v220 = vpop.f32.mrf.mxu0
    %221 = vdwg.mxu0
    %v222 = vld [vmem:[#allocation2 + $0x100] sm:$0xff]
    %v223 = vld [vmem:[#allocation2 + $0x108] sm:$0xff]
    %v224 = vld [vmem:[#allocation2 + $0x110] sm:$0xff]
    %v225 = vld [vmem:[#allocation2 + $0x118] sm:$0xff]
    %v226 = vld [vmem:[#allocation2 + $0x120] sm:$0xff]
    %v227 = vld [vmem:[#allocation2 + $0x128] sm:$0xff]
    %v228 = vld [vmem:[#allocation2 + $0x130] sm:$0xff]
    %v229 = vld [vmem:[#allocation2 + $0x138] sm:$0xff]
    %v230 = vld [vmem:[#allocation2 + $0x140] sm:$0xff]
    %v231 = vld [vmem:[#allocation2 + $0x148] sm:$0xff]
    %v232 = vld [vmem:[#allocation2 + $0x150] sm:$0xff]
    %v233 = vld [vmem:[#allocation2 + $0x158] sm:$0xff]
    %v234 = vld [vmem:[#allocation2 + $0x160] sm:$0xff]
    %v235 = vld [vmem:[#allocation2 + $0x168] sm:$0xff]
    %v236 = vld [vmem:[#allocation2 + $0x170] sm:$0xff]
    %v237 = vld [vmem:[#allocation2 + $0x178] sm:$0xff]
    %v238 = vlaneseq
    %v239 = vshrl.u32 %v238, 7
    %v240 = vsub.s32 2, %v239
    %v241 = vrot.slane %v26, %v240
    %242 = vmatprep.subr.mxu0 0.0
    %243 = vmatpush1.msra.mxu0 %v237
    %244 = vmatprep.subr.mxu0 0.0
    %245 = vmatpush1.msra.mxu0 %v236
    %246 = vmatprep.subr.mxu0 0.0
    %247 = vmatpush1.msra.mxu0 %v235
    %248 = vmatprep.subr.mxu0 0.0
    %249 = vmatpush1.msra.mxu0 %v234
    %250 = vmatprep.subr.mxu0 0.0
    %251 = vmatpush1.msra.mxu0 %v233
    %252 = vmatprep.subr.mxu0 0.0
    %253 = vmatpush1.msra.mxu0 %v232
    %254 = vmatprep.subr.mxu0 0.0
    %255 = vmatpush1.msra.mxu0 %v231
    %256 = vmatprep.subr.mxu0 0.0
    %257 = vmatpush1.msra.mxu0 %v230
    %258 = vmatprep.subr.mxu0 0.0
    %259 = vmatpush1.msra.mxu0 %v229
    %260 = vmatprep.subr.mxu0 0.0
    %261 = vmatpush1.msra.mxu0 %v228
    %262 = vmatprep.subr.mxu0 0.0
    %263 = vmatpush1.msra.mxu0 %v227
    %264 = vmatprep.subr.mxu0 0.0
    %265 = vmatpush1.msra.mxu0 %v226
    %266 = vmatprep.subr.mxu0 0.0
    %267 = vmatpush1.msra.mxu0 %v225
    %268 = vmatprep.subr.mxu0 0.0
    %269 = vmatpush1.msra.mxu0 %v224
    %270 = vmatprep.subr.mxu0 0.0
    %271 = vmatpush1.msra.mxu0 %v223
    %272 = vmatprep.subr.mxu0 0.0
    %273 = vmatpush1.msra.mxu0 %v222
    %274 = vmatprep.subr.mxu0 0.0
    %275 = vmatpush2.msra.mxu0 0.0
    %276 = vmatprep.subr.mxu0 0.0
    %277 = vmatpush2.msra.mxu0 0.0
    %278 = vmatprep.subr.mxu0 0.0
    %279 = vmatpush2.msra.mxu0 0.0
    %280 = vmatprep.subr.mxu0 0.0
    %281 = vmatpush2.msra.mxu0 0.0
    %282 = vmatprep.subr.mxu0 0.0
    %283 = vmatpush2.msra.mxu0 0.0
    %284 = vmatprep.subr.mxu0 0.0
    %285 = vmatpush2.msra.mxu0 0.0
    %286 = vmatprep.subr.mxu0 0.0
    %287 = vmatpush2.msra.mxu0 0.0
    %288 = vmatprep.subr.mxu0 0.0
    %289 = vmatpush2.msra.mxu0 0.0
    %290 = vmatprep.subr.mxu0 0.0
    %291 = vmatpush2.msra.mxu0 0.0
    %292 = vmatprep.subr.mxu0 0.0
    %293 = vmatpush2.msra.mxu0 0.0
    %294 = vmatprep.subr.mxu0 0.0
    %295 = vmatpush2.msra.mxu0 0.0
    %296 = vmatprep.subr.mxu0 0.0
    %297 = vmatpush2.msra.mxu0 0.0
    %298 = vmatprep.subr.mxu0 0.0
    %299 = vmatpush2.msra.mxu0 0.0
    %300 = vmatprep.subr.mxu0 0.0
    %301 = vmatpush2.msra.mxu0 0.0
    %302 = vmatprep.subr.mxu0 0.0
    %303 = vmatpush2.msra.mxu0 0.0
    %304 = vmatprep.subr.mxu0 0.0
    %305 = vmatpush2.msra.mxu0 0.0
    %306 = vmatprep.mubr.f32.mxu0 0.0
    %307 = vmatmul.mubr.f32.gmra.mxu0 %v125
    %v308 = vpop.f32.mrf.mxu0
    %v309 = vadd.f32 %v241, %v308
    %v310 = vpop.f32.mrf.mxu0
    %311 = vmatprep.mubr.f32.mxu0 0.0
    %312 = vmatmul.mubr.f32.gmra.mxu0 %v126
    %v313 = vpop.f32.mrf.mxu0
    %v314 = vadd.f32 %v241, %v313
    %v315 = vpop.f32.mrf.mxu0
    %316 = vdwg.mxu0
    %v317 = vld [vmem:[#allocation2 + $0x180] sm:$0xff]
    %v318 = vld [vmem:[#allocation2 + $0x188] sm:$0xff]
    %v319 = vld [vmem:[#allocation2 + $0x190] sm:$0xff]
    %v320 = vld [vmem:[#allocation2 + $0x198] sm:$0xff]
    %v321 = vld [vmem:[#allocation2 + $0x1a0] sm:$0xff]
    %v322 = vld [vmem:[#allocation2 + $0x1a8] sm:$0xff]
    %v323 = vld [vmem:[#allocation2 + $0x1b0] sm:$0xff]
    %v324 = vld [vmem:[#allocation2 + $0x1b8] sm:$0xff]
    %v325 = vld [vmem:[#allocation2 + $0x1c0] sm:$0xff]
    %v326 = vld [vmem:[#allocation2 + $0x1c8] sm:$0xff]
    %v327 = vld [vmem:[#allocation2 + $0x1d0] sm:$0xff]
    %v328 = vld [vmem:[#allocation2 + $0x1d8] sm:$0xff]
    %v329 = vld [vmem:[#allocation2 + $0x1e0] sm:$0xff]
    %v330 = vld [vmem:[#allocation2 + $0x1e8] sm:$0xff]
    %v331 = vld [vmem:[#allocation2 + $0x1f0] sm:$0xff]
    %v332 = vld [vmem:[#allocation2 + $0x1f8] sm:$0xff]
    %v333 = vlaneseq
    %v334 = vshrl.u32 %v333, 7
    %v335 = vsub.s32 3, %v334
    %v336 = vrot.slane %v26, %v335
    %337 = vmatprep.subr.mxu0 0.0
    %338 = vmatpush1.msra.mxu0 %v332
    %339 = vmatprep.subr.mxu0 0.0
    %340 = vmatpush1.msra.mxu0 %v331
    %341 = vmatprep.subr.mxu0 0.0
    %342 = vmatpush1.msra.mxu0 %v330
    %343 = vmatprep.subr.mxu0 0.0
    %344 = vmatpush1.msra.mxu0 %v329
    %345 = vmatprep.subr.mxu0 0.0
    %346 = vmatpush1.msra.mxu0 %v328
    %347 = vmatprep.subr.mxu0 0.0
    %348 = vmatpush1.msra.mxu0 %v327
    %349 = vmatprep.subr.mxu0 0.0
    %350 = vmatpush1.msra.mxu0 %v326
    %351 = vmatprep.subr.mxu0 0.0
    %352 = vmatpush1.msra.mxu0 %v325
    %353 = vmatprep.subr.mxu0 0.0
    %354 = vmatpush1.msra.mxu0 %v324
    %355 = vmatprep.subr.mxu0 0.0
    %356 = vmatpush1.msra.mxu0 %v323
    %357 = vmatprep.subr.mxu0 0.0
    %358 = vmatpush1.msra.mxu0 %v322
    %359 = vmatprep.subr.mxu0 0.0
    %360 = vmatpush1.msra.mxu0 %v321
    %361 = vmatprep.subr.mxu0 0.0
    %362 = vmatpush1.msra.mxu0 %v320
    %363 = vmatprep.subr.mxu0 0.0
    %364 = vmatpush1.msra.mxu0 %v319
    %365 = vmatprep.subr.mxu0 0.0
    %366 = vmatpush1.msra.mxu0 %v318
    %367 = vmatprep.subr.mxu0 0.0
    %368 = vmatpush1.msra.mxu0 %v317
    %369 = vmatprep.subr.mxu0 0.0
    %370 = vmatpush2.msra.mxu0 0.0
    %371 = vmatprep.subr.mxu0 0.0
    %372 = vmatpush2.msra.mxu0 0.0
    %373 = vmatprep.subr.mxu0 0.0
    %374 = vmatpush2.msra.mxu0 0.0
    %375 = vmatprep.subr.mxu0 0.0
    %376 = vmatpush2.msra.mxu0 0.0
    %377 = vmatprep.subr.mxu0 0.0
    %378 = vmatpush2.msra.mxu0 0.0
    %379 = vmatprep.subr.mxu0 0.0
    %380 = vmatpush2.msra.mxu0 0.0
    %381 = vmatprep.subr.mxu0 0.0
    %382 = vmatpush2.msra.mxu0 0.0
    %383 = vmatprep.subr.mxu0 0.0
    %384 = vmatpush2.msra.mxu0 0.0
    %385 = vmatprep.subr.mxu0 0.0
    %386 = vmatpush2.msra.mxu0 0.0
    %387 = vmatprep.subr.mxu0 0.0
    %388 = vmatpush2.msra.mxu0 0.0
    %389 = vmatprep.subr.mxu0 0.0
    %390 = vmatpush2.msra.mxu0 0.0
    %391 = vmatprep.subr.mxu0 0.0
    %392 = vmatpush2.msra.mxu0 0.0
    %393 = vmatprep.subr.mxu0 0.0
    %394 = vmatpush2.msra.mxu0 0.0
    %395 = vmatprep.subr.mxu0 0.0
    %396 = vmatpush2.msra.mxu0 0.0
    %397 = vmatprep.subr.mxu0 0.0
    %398 = vmatpush2.msra.mxu0 0.0
    %399 = vmatprep.subr.mxu0 0.0
    %400 = vmatpush2.msra.mxu0 0.0
    %401 = vmatprep.mubr.f32.mxu0 0.0
    %402 = vmatmul.mubr.f32.gmra.mxu0 %v125
    %v403 = vpop.f32.mrf.mxu0
    %v404 = vadd.f32 %v336, %v403
    %v405 = vpop.f32.mrf.mxu0
    %406 = vmatprep.mubr.f32.mxu0 0.0
    %407 = vmatmul.mubr.f32.gmra.mxu0 %v126
    %v408 = vpop.f32.mrf.mxu0
    %v409 = vadd.f32 %v336, %v408
    %v410 = vpop.f32.mrf.mxu0
    %411 = vdwg.mxu0
    %v412 = vld [vmem:[#allocation2 + $0x200] sm:$0xff]
    %v413 = vld [vmem:[#allocation2 + $0x208] sm:$0xff]
    %v414 = vld [vmem:[#allocation2 + $0x210] sm:$0xff]
    %v415 = vld [vmem:[#allocation2 + $0x218] sm:$0xff]
    %v416 = vld [vmem:[#allocation2 + $0x220] sm:$0xff]
    %v417 = vld [vmem:[#allocation2 + $0x228] sm:$0xff]
    %v418 = vld [vmem:[#allocation2 + $0x230] sm:$0xff]
    %v419 = vld [vmem:[#allocation2 + $0x238] sm:$0xff]
    %v420 = vld [vmem:[#allocation2 + $0x240] sm:$0xff]
    %v421 = vld [vmem:[#allocation2 + $0x248] sm:$0xff]
    %v422 = vld [vmem:[#allocation2 + $0x250] sm:$0xff]
    %v423 = vld [vmem:[#allocation2 + $0x258] sm:$0xff]
    %v424 = vld [vmem:[#allocation2 + $0x260] sm:$0xff]
    %v425 = vld [vmem:[#allocation2 + $0x268] sm:$0xff]
    %v426 = vld [vmem:[#allocation2 + $0x270] sm:$0xff]
    %v427 = vld [vmem:[#allocation2 + $0x278] sm:$0xff]
    %v428 = vld [vmem:[#allocation2 + $0x280] sm:$0xff]
    %v429 = vld [vmem:[#allocation2 + $0x288] sm:$0xff]
    %v430 = vld [vmem:[#allocation2 + $0x290] sm:$0xff]
    %v431 = vld [vmem:[#allocation2 + $0x298] sm:$0xff]
    %v432 = vld [vmem:[#allocation2 + $0x2a0] sm:$0xff]
    %v433 = vld [vmem:[#allocation2 + $0x2a8] sm:$0xff]
    %v434 = vld [vmem:[#allocation2 + $0x2b0] sm:$0xff]
    %v435 = vld [vmem:[#allocation2 + $0x2b8] sm:$0xff]
    %v436 = vld [vmem:[#allocation2 + $0x2c0] sm:$0xff]
    %v437 = vld [vmem:[#allocation2 + $0x2c8] sm:$0xff]
    %v438 = vld [vmem:[#allocation2 + $0x2d0] sm:$0xff]
    %v439 = vld [vmem:[#allocation2 + $0x2d8] sm:$0xff]
    %v440 = vld [vmem:[#allocation2 + $0x2e0] sm:$0xff]
    %v441 = vld [vmem:[#allocation2 + $0x2e8] sm:$0xff]
    %v442 = vld [vmem:[#allocation2 + $0x2f0] sm:$0xff]
    %v443 = vld [vmem:[#allocation2 + $0x2f8] sm:$0xff]
    %v444 = vmul.f32 %v214, %v309
    %v445 = vmul.f32 %v219, %v309
    %446 = vmatprep.subr.mxu0 0.0
    %447 = vmatpush1.msra.mxu0 %v427
    %448 = vmatprep.subr.mxu0 0.0
    %449 = vmatpush1.msra.mxu0 %v426
    %450 = vmatprep.subr.mxu0 0.0
    %451 = vmatpush1.msra.mxu0 %v425
    %452 = vmatprep.subr.mxu0 0.0
    %453 = vmatpush1.msra.mxu0 %v424
    %454 = vmatprep.subr.mxu0 0.0
    %455 = vmatpush1.msra.mxu0 %v423
    %456 = vmatprep.subr.mxu0 0.0
    %457 = vmatpush1.msra.mxu0 %v422
    %458 = vmatprep.subr.mxu0 0.0
    %459 = vmatpush1.msra.mxu0 %v421
    %460 = vmatprep.subr.mxu0 0.0
    %461 = vmatpush1.msra.mxu0 %v420
    %462 = vmatprep.subr.mxu0 0.0
    %463 = vmatpush1.msra.mxu0 %v419
    %464 = vmatprep.subr.mxu0 0.0
    %465 = vmatpush1.msra.mxu0 %v418
    %466 = vmatprep.subr.mxu0 0.0
    %467 = vmatpush1.msra.mxu0 %v417
    %468 = vmatprep.subr.mxu0 0.0
    %469 = vmatpush1.msra.mxu0 %v416
    %470 = vmatprep.subr.mxu0 0.0
    %471 = vmatpush1.msra.mxu0 %v415
    %472 = vmatprep.subr.mxu0 0.0
    %473 = vmatpush1.msra.mxu0 %v414
    %474 = vmatprep.subr.mxu0 0.0
    %475 = vmatpush1.msra.mxu0 %v413
    %476 = vmatprep.subr.mxu0 0.0
    %477 = vmatpush1.msra.mxu0 %v412
    %478 = vmatprep.subr.mxu0 0.0
    %479 = vmatpush2.msra.mxu0 0.0
    %480 = vmatprep.subr.mxu0 0.0
    %481 = vmatpush2.msra.mxu0 0.0
    %482 = vmatprep.subr.mxu0 0.0
    %483 = vmatpush2.msra.mxu0 0.0
    %484 = vmatprep.subr.mxu0 0.0
    %485 = vmatpush2.msra.mxu0 0.0
    %486 = vmatprep.subr.mxu0 0.0
    %487 = vmatpush2.msra.mxu0 0.0
    %488 = vmatprep.subr.mxu0 0.0
    %489 = vmatpush2.msra.mxu0 0.0
    %490 = vmatprep.subr.mxu0 0.0
    %491 = vmatpush2.msra.mxu0 0.0
    %492 = vmatprep.subr.mxu0 0.0
    %493 = vmatpush2.msra.mxu0 0.0
    %494 = vmatprep.subr.mxu0 0.0
    %495 = vmatpush2.msra.mxu0 0.0
    %496 = vmatprep.subr.mxu0 0.0
    %497 = vmatpush2.msra.mxu0 0.0
    %498 = vmatprep.subr.mxu0 0.0
    %499 = vmatpush2.msra.mxu0 0.0
    %500 = vmatprep.subr.mxu0 0.0
    %501 = vmatpush2.msra.mxu0 0.0
    %502 = vmatprep.subr.mxu0 0.0
    %503 = vmatpush2.msra.mxu0 0.0
    %504 = vmatprep.subr.mxu0 0.0
    %505 = vmatpush2.msra.mxu0 0.0
    %506 = vmatprep.subr.mxu0 0.0
    %507 = vmatpush2.msra.mxu0 0.0
    %508 = vmatprep.subr.mxu0 0.0
    %509 = vmatpush2.msra.mxu0 0.0
    %510 = vmatprep.mubr.f32.mxu0 0.0
    %511 = vmatmul.mubr.f32.gmra.mxu0 %v444
    %v512 = vpop.f32.mrf.mxu0
    %v513 = vadd.f32 0.0, %v512
    %v514 = vpop.f32.mrf.mxu0
    %515 = vmatprep.mubr.f32.mxu0 0.0
    %516 = vmatmul.mubr.f32.gmra.mxu0 %v445
    %v517 = vpop.f32.mrf.mxu0
    %v518 = vadd.f32 0.0, %v517
    %v519 = vpop.f32.mrf.mxu0
    %520 = vdwg.mxu0
    %v521 = vmul.f32 %v513, 0.5
    %v522 = vmul.f32 %v518, 0.5
    %v523 = vmul.f32 %v214, %v314
    %v524 = vmul.f32 %v219, %v314
    %525 = vmatprep.subr.mxu0 0.0
    %526 = vmatpush1.msra.mxu0 %v427
    %527 = vmatprep.subr.mxu0 0.0
    %528 = vmatpush1.msra.mxu0 %v426
    %529 = vmatprep.subr.mxu0 0.0
    %530 = vmatpush1.msra.mxu0 %v425
    %531 = vmatprep.subr.mxu0 0.0
    %532 = vmatpush1.msra.mxu0 %v424
    %533 = vmatprep.subr.mxu0 0.0
    %534 = vmatpush1.msra.mxu0 %v423
    %535 = vmatprep.subr.mxu0 0.0
    %536 = vmatpush1.msra.mxu0 %v422
    %537 = vmatprep.subr.mxu0 0.0
    %538 = vmatpush1.msra.mxu0 %v421
    %539 = vmatprep.subr.mxu0 0.0
    %540 = vmatpush1.msra.mxu0 %v420
    %541 = vmatprep.subr.mxu0 0.0
    %542 = vmatpush1.msra.mxu0 %v419
    %543 = vmatprep.subr.mxu0 0.0
    %544 = vmatpush1.msra.mxu0 %v418
    %545 = vmatprep.subr.mxu0 0.0
    %546 = vmatpush1.msra.mxu0 %v417
    %547 = vmatprep.subr.mxu0 0.0
    %548 = vmatpush1.msra.mxu0 %v416
    %549 = vmatprep.subr.mxu0 0.0
    %550 = vmatpush1.msra.mxu0 %v415
    %551 = vmatprep.subr.mxu0 0.0
    %552 = vmatpush1.msra.mxu0 %v414
    %553 = vmatprep.subr.mxu0 0.0
    %554 = vmatpush1.msra.mxu0 %v413
    %555 = vmatprep.subr.mxu0 0.0
    %556 = vmatpush1.msra.mxu0 %v412
    %557 = vmatprep.subr.mxu0 0.0
    %558 = vmatpush2.msra.mxu0 0.0
    %559 = vmatprep.subr.mxu0 0.0
    %560 = vmatpush2.msra.mxu0 0.0
    %561 = vmatprep.subr.mxu0 0.0
    %562 = vmatpush2.msra.mxu0 0.0
    %563 = vmatprep.subr.mxu0 0.0
    %564 = vmatpush2.msra.mxu0 0.0
    %565 = vmatprep.subr.mxu0 0.0
    %566 = vmatpush2.msra.mxu0 0.0
    %567 = vmatprep.subr.mxu0 0.0
    %568 = vmatpush2.msra.mxu0 0.0
    %569 = vmatprep.subr.mxu0 0.0
    %570 = vmatpush2.msra.mxu0 0.0
    %571 = vmatprep.subr.mxu0 0.0
    %572 = vmatpush2.msra.mxu0 0.0
    %573 = vmatprep.subr.mxu0 0.0
    %574 = vmatpush2.msra.mxu0 0.0
    %575 = vmatprep.subr.mxu0 0.0
    %576 = vmatpush2.msra.mxu0 0.0
    %577 = vmatprep.subr.mxu0 0.0
    %578 = vmatpush2.msra.mxu0 0.0
    %579 = vmatprep.subr.mxu0 0.0
    %580 = vmatpush2.msra.mxu0 0.0
    %581 = vmatprep.subr.mxu0 0.0
    %582 = vmatpush2.msra.mxu0 0.0
    %583 = vmatprep.subr.mxu0 0.0
    %584 = vmatpush2.msra.mxu0 0.0
    %585 = vmatprep.subr.mxu0 0.0
    %586 = vmatpush2.msra.mxu0 0.0
    %587 = vmatprep.subr.mxu0 0.0
    %588 = vmatpush2.msra.mxu0 0.0
    %589 = vmatprep.mubr.f32.mxu0 0.0
    %590 = vmatmul.mubr.f32.gmra.mxu0 %v523
    %v591 = vpop.f32.mrf.mxu0
    %v592 = vadd.f32 0.0, %v591
    %v593 = vpop.f32.mrf.mxu0
    %594 = vmatprep.mubr.f32.mxu0 0.0
    %595 = vmatmul.mubr.f32.gmra.mxu0 %v524
    %v596 = vpop.f32.mrf.mxu0
    %v597 = vadd.f32 0.0, %v596
    %v598 = vpop.f32.mrf.mxu0
    %599 = vdwg.mxu0
    %v600 = vmul.f32 %v592, 0.5
    %v601 = vmul.f32 %v597, 0.5
    %v602 = vmax.f32 %v521, %v600
    %v603 = vmax.f32 %v522, %v601
    %v604 = vsub.f32 %v521, %v602
    %v605 = vsub.f32 %v522, %v603
    %v606 = vmul.f32 %v604, 1.442695
    %v607 = vpow.pop %v606
    %v608 = vmul.f32 %v605, 1.442695
    %v609 = vpow.pop %v608
    %v610 = vsub.f32 %v600, %v602
    %v611 = vsub.f32 %v601, %v603
    %v612 = vmul.f32 %v610, 1.442695
    %v613 = vpow.pop %v612
    %v614 = vmul.f32 %v611, 1.442695
    %v615 = vpow.pop %v614
    %v616 = vadd.f32 %v607, %v613
    %v617 = vadd.f32 %v609, %v615
    %v618 = vrcp.pop %v616
    %v619 = vrcp.pop %v617
    %v620 = vmul.f32 %v607, %v618
    %v621 = vmul.f32 %v609, %v619
    %622 = vmatprep.subr.mxu0 0.0
    %623 = vmatpush1.msra.mxu0 %v443
    %624 = vmatprep.subr.mxu0 0.0
    %625 = vmatpush1.msra.mxu0 %v442
    %626 = vmatprep.subr.mxu0 0.0
    %627 = vmatpush1.msra.mxu0 %v441
    %628 = vmatprep.subr.mxu0 0.0
    %629 = vmatpush1.msra.mxu0 %v440
    %630 = vmatprep.subr.mxu0 0.0
    %631 = vmatpush1.msra.mxu0 %v439
    %632 = vmatprep.subr.mxu0 0.0
    %633 = vmatpush1.msra.mxu0 %v438
    %634 = vmatprep.subr.mxu0 0.0
    %635 = vmatpush1.msra.mxu0 %v437
    %636 = vmatprep.subr.mxu0 0.0
    %637 = vmatpush1.msra.mxu0 %v436
    %638 = vmatprep.subr.mxu0 0.0
    %639 = vmatpush1.msra.mxu0 %v435
    %640 = vmatprep.subr.mxu0 0.0
    %641 = vmatpush1.msra.mxu0 %v434
    %642 = vmatprep.subr.mxu0 0.0
    %643 = vmatpush1.msra.mxu0 %v433
    %644 = vmatprep.subr.mxu0 0.0
    %645 = vmatpush1.msra.mxu0 %v432
    %646 = vmatprep.subr.mxu0 0.0
    %647 = vmatpush1.msra.mxu0 %v431
    %648 = vmatprep.subr.mxu0 0.0
    %649 = vmatpush1.msra.mxu0 %v430
    %650 = vmatprep.subr.mxu0 0.0
    %651 = vmatpush1.msra.mxu0 %v429
    %652 = vmatprep.subr.mxu0 0.0
    %653 = vmatpush1.msra.mxu0 %v428
    %654 = vmatprep.subr.mxu0 0.0
    %655 = vmatpush2.msra.mxu0 0.0
    %656 = vmatprep.subr.mxu0 0.0
    %657 = vmatpush2.msra.mxu0 0.0
    %658 = vmatprep.subr.mxu0 0.0
    %659 = vmatpush2.msra.mxu0 0.0
    %660 = vmatprep.subr.mxu0 0.0
    %661 = vmatpush2.msra.mxu0 0.0
    %662 = vmatprep.subr.mxu0 0.0
    %663 = vmatpush2.msra.mxu0 0.0
    %664 = vmatprep.subr.mxu0 0.0
    %665 = vmatpush2.msra.mxu0 0.0
    %666 = vmatprep.subr.mxu0 0.0
    %667 = vmatpush2.msra.mxu0 0.0
    %668 = vmatprep.subr.mxu0 0.0
    %669 = vmatpush2.msra.mxu0 0.0
    %670 = vmatprep.subr.mxu0 0.0
    %671 = vmatpush2.msra.mxu0 0.0
    %672 = vmatprep.subr.mxu0 0.0
    %673 = vmatpush2.msra.mxu0 0.0
    %674 = vmatprep.subr.mxu0 0.0
    %675 = vmatpush2.msra.mxu0 0.0
    %676 = vmatprep.subr.mxu0 0.0
    %677 = vmatpush2.msra.mxu0 0.0
    %678 = vmatprep.subr.mxu0 0.0
    %679 = vmatpush2.msra.mxu0 0.0
    %680 = vmatprep.subr.mxu0 0.0
    %681 = vmatpush2.msra.mxu0 0.0
    %682 = vmatprep.subr.mxu0 0.0
    %683 = vmatpush2.msra.mxu0 0.0
    %684 = vmatprep.subr.mxu0 0.0
    %685 = vmatpush2.msra.mxu0 0.0
    %686 = vmatprep.mubr.f32.mxu0 0.0
    %687 = vmatmul.mubr.f32.gmra.mxu0 %v620
    %v688 = vpop.f32.mrf.mxu0
    %v689 = vadd.f32 0.0, %v688
    %v690 = vpop.f32.mrf.mxu0
    %691 = vmatprep.mubr.f32.mxu0 0.0
    %692 = vmatmul.mubr.f32.gmra.mxu0 %v621
    %v693 = vpop.f32.mrf.mxu0
    %v694 = vadd.f32 0.0, %v693
    %v695 = vpop.f32.mrf.mxu0
    %696 = vdwg.mxu0
    %v697 = vmul.f32 %v689, %v404
    %v698 = vmul.f32 %v694, %v404
    %v699 = vmul.f32 %v613, %v618
    %v700 = vmul.f32 %v615, %v619
    %701 = vmatprep.subr.mxu0 0.0
    %702 = vmatpush1.msra.mxu0 %v443
    %703 = vmatprep.subr.mxu0 0.0
    %704 = vmatpush1.msra.mxu0 %v442
    %705 = vmatprep.subr.mxu0 0.0
    %706 = vmatpush1.msra.mxu0 %v441
    %707 = vmatprep.subr.mxu0 0.0
    %708 = vmatpush1.msra.mxu0 %v440
    %709 = vmatprep.subr.mxu0 0.0
    %710 = vmatpush1.msra.mxu0 %v439
    %711 = vmatprep.subr.mxu0 0.0
    %712 = vmatpush1.msra.mxu0 %v438
    %713 = vmatprep.subr.mxu0 0.0
    %714 = vmatpush1.msra.mxu0 %v437
    %715 = vmatprep.subr.mxu0 0.0
    %716 = vmatpush1.msra.mxu0 %v436
    %717 = vmatprep.subr.mxu0 0.0
    %718 = vmatpush1.msra.mxu0 %v435
    %719 = vmatprep.subr.mxu0 0.0
    %720 = vmatpush1.msra.mxu0 %v434
    %721 = vmatprep.subr.mxu0 0.0
    %722 = vmatpush1.msra.mxu0 %v433
    %723 = vmatprep.subr.mxu0 0.0
    %724 = vmatpush1.msra.mxu0 %v432
    %725 = vmatprep.subr.mxu0 0.0
    %726 = vmatpush1.msra.mxu0 %v431
    %727 = vmatprep.subr.mxu0 0.0
    %728 = vmatpush1.msra.mxu0 %v430
    %729 = vmatprep.subr.mxu0 0.0
    %730 = vmatpush1.msra.mxu0 %v429
    %731 = vmatprep.subr.mxu0 0.0
    %732 = vmatpush1.msra.mxu0 %v428
    %733 = vmatprep.subr.mxu0 0.0
    %734 = vmatpush2.msra.mxu0 0.0
    %735 = vmatprep.subr.mxu0 0.0
    %736 = vmatpush2.msra.mxu0 0.0
    %737 = vmatprep.subr.mxu0 0.0
    %738 = vmatpush2.msra.mxu0 0.0
    %739 = vmatprep.subr.mxu0 0.0
    %740 = vmatpush2.msra.mxu0 0.0
    %741 = vmatprep.subr.mxu0 0.0
    %742 = vmatpush2.msra.mxu0 0.0
    %743 = vmatprep.subr.mxu0 0.0
    %744 = vmatpush2.msra.mxu0 0.0
    %745 = vmatprep.subr.mxu0 0.0
    %746 = vmatpush2.msra.mxu0 0.0
    %747 = vmatprep.subr.mxu0 0.0
    %748 = vmatpush2.msra.mxu0 0.0
    %749 = vmatprep.subr.mxu0 0.0
    %750 = vmatpush2.msra.mxu0 0.0
    %751 = vmatprep.subr.mxu0 0.0
    %752 = vmatpush2.msra.mxu0 0.0
    %753 = vmatprep.subr.mxu0 0.0
    %754 = vmatpush2.msra.mxu0 0.0
    %755 = vmatprep.subr.mxu0 0.0
    %756 = vmatpush2.msra.mxu0 0.0
    %757 = vmatprep.subr.mxu0 0.0
    %758 = vmatpush2.msra.mxu0 0.0
    %759 = vmatprep.subr.mxu0 0.0
    %760 = vmatpush2.msra.mxu0 0.0
    %761 = vmatprep.subr.mxu0 0.0
    %762 = vmatpush2.msra.mxu0 0.0
    %763 = vmatprep.subr.mxu0 0.0
    %764 = vmatpush2.msra.mxu0 0.0
    %765 = vmatprep.mubr.f32.mxu0 0.0
    %766 = vmatmul.mubr.f32.gmra.mxu0 %v699
    %v767 = vpop.f32.mrf.mxu0
    %v768 = vadd.f32 0.0, %v767
    %v769 = vpop.f32.mrf.mxu0
    %770 = vmatprep.mubr.f32.mxu0 0.0
    %771 = vmatmul.mubr.f32.gmra.mxu0 %v700
    %v772 = vpop.f32.mrf.mxu0
    %v773 = vadd.f32 0.0, %v772
    %v774 = vpop.f32.mrf.mxu0
    %775 = vdwg.mxu0
    %v776 = vmul.f32 %v768, %v409
    %v777 = vmul.f32 %v773, %v409
    %v778 = vadd.f32 %v697, %v776
    %v779 = vadd.f32 %v698, %v777
    %v780 = vld [vmem:[#allocation2 + $0x300] sm:$0xff]
    %v781 = vld [vmem:[#allocation2 + $0x308] sm:$0xff]
    %v782 = vld [vmem:[#allocation2 + $0x310] sm:$0xff]
    %v783 = vld [vmem:[#allocation2 + $0x318] sm:$0xff]
    %v784 = vld [vmem:[#allocation2 + $0x320] sm:$0xff]
    %v785 = vld [vmem:[#allocation2 + $0x328] sm:$0xff]
    %v786 = vld [vmem:[#allocation2 + $0x330] sm:$0xff]
    %v787 = vld [vmem:[#allocation2 + $0x338] sm:$0xff]
    %v788 = vld [vmem:[#allocation2 + $0x340] sm:$0xff]
    %v789 = vld [vmem:[#allocation2 + $0x348] sm:$0xff]
    %v790 = vld [vmem:[#allocation2 + $0x350] sm:$0xff]
    %v791 = vld [vmem:[#allocation2 + $0x358] sm:$0xff]
    %v792 = vld [vmem:[#allocation2 + $0x360] sm:$0xff]
    %v793 = vld [vmem:[#allocation2 + $0x368] sm:$0xff]
    %v794 = vld [vmem:[#allocation2 + $0x370] sm:$0xff]
    %v795 = vld [vmem:[#allocation2 + $0x378] sm:$0xff]
    %v796 = vlaneseq
    %v797 = vshrl.u32 %v796, 7
    %v798 = vsub.s32 4, %v797
    %v799 = vrot.slane %v26, %v798
    %800 = vmatprep.subr.mxu0 0.0
    %801 = vmatpush1.msra.mxu0 %v795
    %802 = vmatprep.subr.mxu0 0.0
    %803 = vmatpush1.msra.mxu0 %v794
    %804 = vmatprep.subr.mxu0 0.0
    %805 = vmatpush1.msra.mxu0 %v793
    %806 = vmatprep.subr.mxu0 0.0
    %807 = vmatpush1.msra.mxu0 %v792
    %808 = vmatprep.subr.mxu0 0.0
    %809 = vmatpush1.msra.mxu0 %v791
    %810 = vmatprep.subr.mxu0 0.0
    %811 = vmatpush1.msra.mxu0 %v790
    %812 = vmatprep.subr.mxu0 0.0
    %813 = vmatpush1.msra.mxu0 %v789
    %814 = vmatprep.subr.mxu0 0.0
    %815 = vmatpush1.msra.mxu0 %v788
    %816 = vmatprep.subr.mxu0 0.0
    %817 = vmatpush1.msra.mxu0 %v787
    %818 = vmatprep.subr.mxu0 0.0
    %819 = vmatpush1.msra.mxu0 %v786
    %820 = vmatprep.subr.mxu0 0.0
    %821 = vmatpush1.msra.mxu0 %v785
    %822 = vmatprep.subr.mxu0 0.0
    %823 = vmatpush1.msra.mxu0 %v784
    %824 = vmatprep.subr.mxu0 0.0
    %825 = vmatpush1.msra.mxu0 %v783
    %826 = vmatprep.subr.mxu0 0.0
    %827 = vmatpush1.msra.mxu0 %v782
    %828 = vmatprep.subr.mxu0 0.0
    %829 = vmatpush1.msra.mxu0 %v781
    %830 = vmatprep.subr.mxu0 0.0
    %831 = vmatpush1.msra.mxu0 %v780
    %832 = vmatprep.subr.mxu0 0.0
    %833 = vmatpush2.msra.mxu0 0.0
    %834 = vmatprep.subr.mxu0 0.0
    %835 = vmatpush2.msra.mxu0 0.0
    %836 = vmatprep.subr.mxu0 0.0
    %837 = vmatpush2.msra.mxu0 0.0
    %838 = vmatprep.subr.mxu0 0.0
    %839 = vmatpush2.msra.mxu0 0.0
    %840 = vmatprep.subr.mxu0 0.0
    %841 = vmatpush2.msra.mxu0 0.0
    %842 = vmatprep.subr.mxu0 0.0
    %843 = vmatpush2.msra.mxu0 0.0
    %844 = vmatprep.subr.mxu0 0.0
    %845 = vmatpush2.msra.mxu0 0.0
    %846 = vmatprep.subr.mxu0 0.0
    %847 = vmatpush2.msra.mxu0 0.0
    %848 = vmatprep.subr.mxu0 0.0
    %849 = vmatpush2.msra.mxu0 0.0
    %850 = vmatprep.subr.mxu0 0.0
    %851 = vmatpush2.msra.mxu0 0.0
    %852 = vmatprep.subr.mxu0 0.0
    %853 = vmatpush2.msra.mxu0 0.0
    %854 = vmatprep.subr.mxu0 0.0
    %855 = vmatpush2.msra.mxu0 0.0
    %856 = vmatprep.subr.mxu0 0.0
    %857 = vmatpush2.msra.mxu0 0.0
    %858 = vmatprep.subr.mxu0 0.0
    %859 = vmatpush2.msra.mxu0 0.0
    %860 = vmatprep.subr.mxu0 0.0
    %861 = vmatpush2.msra.mxu0 0.0
    %862 = vmatprep.subr.mxu0 0.0
    %863 = vmatpush2.msra.mxu0 0.0
    %864 = vmatprep.mubr.f32.mxu0 0.0
    %865 = vmatmul.mubr.f32.gmra.mxu0 %v778
    %v866 = vpop.f32.mrf.mxu0
    %v867 = vadd.f32 %v799, %v866
    %v868 = vpop.f32.mrf.mxu0
    %869 = vmatprep.mubr.f32.mxu0 0.0
    %870 = vmatmul.mubr.f32.gmra.mxu0 %v779
    %v871 = vpop.f32.mrf.mxu0
    %v872 = vadd.f32 %v799, %v871
    %v873 = vpop.f32.mrf.mxu0
    %874 = vdwg.mxu0
    %v875 = vadd.f32 %v125, %v867
    %v876 = vadd.f32 %v126, %v872
    %877 = vadd.xlane.f32.xlu0 %v875
    %v878 = vpop.xlane.xlu0 %877
    %879 = vadd.xlane.f32.xlu0 %v876
    %v880 = vpop.xlane.xlu0 %879
    %v881 = vmul.f32 %v878, 0.03125
    %v882 = vmul.f32 %v880, 0.03125
    %v883 = vmul.f32 %v875, %v875
    %v884 = vmul.f32 %v876, %v876
    %885 = vadd.xlane.f32.xlu0 %v883
    %v886 = vpop.xlane.xlu0 %885
    %887 = vadd.xlane.f32.xlu0 %v884
    %v888 = vpop.xlane.xlu0 %887
    %v889 = vmul.f32 %v886, 0.03125
    %v890 = vmul.f32 %v888, 0.03125
    %v891 = vmul.f32 %v881, %v881
    %v892 = vmul.f32 %v882, %v882
    %v893 = vsub.f32 %v889, %v891
    %v894 = vsub.f32 %v890, %v892
    %v895 = vsub.f32 %v875, %v881
    %v896 = vsub.f32 %v876, %v882
    %v897 = vlaneseq
    %v898 = vshrl.u32 %v897, 7
    %v899 = vsub.s32 7, %v898
    %v900 = vrot.slane %v26, %v899
    %v901 = vmul.f32 %v900, %v895
    %v902 = vmul.f32 %v900, %v896
    %v903 = vadd.f32 %v893, 1e-05
    %v904 = vadd.f32 %v894, 1e-05
    %v905 = vrsqrt.pop %v903
    %v906 = vrsqrt.pop %v904
    %v907 = vmul.f32 %v901, %v905
    %v908 = vmul.f32 %v902, %v906
    %v909 = vlaneseq
    %v910 = vshrl.u32 %v909, 7
    %v911 = vsub.s32 0, %v910
    %v912 = vrot.slane %v27, %v911
    %v913 = vadd.f32 %v907, %v912
    %v914 = vadd.f32 %v908, %v912
    %v915 = vld [vmem:[#allocation2 + $0x380] sm:$0xff]
    %v916 = vld [vmem:[#allocation2 + $0x388] sm:$0xff]
    %v917 = vld [vmem:[#allocation2 + $0x390] sm:$0xff]
    %v918 = vld [vmem:[#allocation2 + $0x398] sm:$0xff]
    %v919 = vld [vmem:[#allocation2 + $0x3a0] sm:$0xff]
    %v920 = vld [vmem:[#allocation2 + $0x3a8] sm:$0xff]
    %v921 = vld [vmem:[#allocation2 + $0x3b0] sm:$0xff]
    %v922 = vld [vmem:[#allocation2 + $0x3b8] sm:$0xff]
    %v923 = vld [vmem:[#allocation2 + $0x3c0] sm:$0xff]
    %v924 = vld [vmem:[#allocation2 + $0x3c8] sm:$0xff]
    %v925 = vld [vmem:[#allocation2 + $0x3d0] sm:$0xff]
    %v926 = vld [vmem:[#allocation2 + $0x3d8] sm:$0xff]
    %v927 = vld [vmem:[#allocation2 + $0x3e0] sm:$0xff]
    %v928 = vld [vmem:[#allocation2 + $0x3e8] sm:$0xff]
    %v929 = vld [vmem:[#allocation2 + $0x3f0] sm:$0xff]
    %v930 = vld [vmem:[#allocation2 + $0x3f8] sm:$0xff]
    %v931 = vlaneseq
    %v932 = vshrl.u32 %v931, 7
    %v933 = vsub.s32 5, %v932
    %v934 = vrot.slane %v26, %v933
    %935 = vmatprep.subr.mxu0 0.0
    %936 = vmatpush1.msra.mxu0 %v930
    %937 = vmatprep.subr.mxu0 0.0
    %938 = vmatpush1.msra.mxu0 %v929
    %939 = vmatprep.subr.mxu0 0.0
    %940 = vmatpush1.msra.mxu0 %v928
    %941 = vmatprep.subr.mxu0 0.0
    %942 = vmatpush1.msra.mxu0 %v927
    %943 = vmatprep.subr.mxu0 0.0
    %944 = vmatpush1.msra.mxu0 %v926
    %945 = vmatprep.subr.mxu0 0.0
    %946 = vmatpush1.msra.mxu0 %v925
    %947 = vmatprep.subr.mxu0 0.0
    %948 = vmatpush1.msra.mxu0 %v924
    %949 = vmatprep.subr.mxu0 0.0
    %950 = vmatpush1.msra.mxu0 %v923
    %951 = vmatprep.subr.mxu0 0.0
    %952 = vmatpush1.msra.mxu0 %v922
    %953 = vmatprep.subr.mxu0 0.0
    %954 = vmatpush1.msra.mxu0 %v921
    %955 = vmatprep.subr.mxu0 0.0
    %956 = vmatpush1.msra.mxu0 %v920
    %957 = vmatprep.subr.mxu0 0.0
    %958 = vmatpush1.msra.mxu0 %v919
    %959 = vmatprep.subr.mxu0 0.0
    %960 = vmatpush1.msra.mxu0 %v918
    %961 = vmatprep.subr.mxu0 0.0
    %962 = vmatpush1.msra.mxu0 %v917
    %963 = vmatprep.subr.mxu0 0.0
    %964 = vmatpush1.msra.mxu0 %v916
    %965 = vmatprep.subr.mxu0 0.0
    %966 = vmatpush1.msra.mxu0 %v915
    %967 = vmatprep.subr.mxu0 0.0
    %968 = vmatpush2.msra.mxu0 0.0
    %969 = vmatprep.subr.mxu0 0.0
    %970 = vmatpush2.msra.mxu0 0.0
    %971 = vmatprep.subr.mxu0 0.0
    %972 = vmatpush2.msra.mxu0 0.0
    %973 = vmatprep.subr.mxu0 0.0
    %974 = vmatpush2.msra.mxu0 0.0
    %975 = vmatprep.subr.mxu0 0.0
    %976 = vmatpush2.msra.mxu0 0.0
    %977 = vmatprep.subr.mxu0 0.0
    %978 = vmatpush2.msra.mxu0 0.0
    %979 = vmatprep.subr.mxu0 0.0
    %980 = vmatpush2.msra.mxu0 0.0
    %981 = vmatprep.subr.mxu0 0.0
    %982 = vmatpush2.msra.mxu0 0.0
    %983 = vmatprep.subr.mxu0 0.0
    %984 = vmatpush2.msra.mxu0 0.0
    %985 = vmatprep.subr.mxu0 0.0
    %986 = vmatpush2.msra.mxu0 0.0
    %987 = vmatprep.subr.mxu0 0.0
    %988 = vmatpush2.msra.mxu0 0.0
    %989 = vmatprep.subr.mxu0 0.0
    %990 = vmatpush2.msra.mxu0 0.0
    %991 = vmatprep.subr.mxu0 0.0
    %992 = vmatpush2.msra.mxu0 0.0
    %993 = vmatprep.subr.mxu0 0.0
    %994 = vmatpush2.msra.mxu0 0.0
    %995 = vmatprep.subr.mxu0 0.0
    %996 = vmatpush2.msra.mxu0 0.0
    %997 = vmatprep.subr.mxu0 0.0
    %998 = vmatpush2.msra.mxu0 0.0
    %999 = vmatprep.mubr.f32.mxu0 0.0
    %1000 = vmatmul.mubr.f32.gmra.mxu0 %v913
    %v1001 = vpop.f32.mrf.mxu0
    %v1002 = vadd.f32 %v934, %v1001
    %v1003 = vpop.f32.mrf.mxu0
    %1004 = vmatprep.mubr.f32.mxu0 0.0
    %1005 = vmatmul.mubr.f32.gmra.mxu0 %v914
    %v1006 = vpop.f32.mrf.mxu0
    %v1007 = vadd.f32 %v934, %v1006
    %v1008 = vpop.f32.mrf.mxu0
    %1009 = vdwg.mxu0
    %v1010 = vmax.f32 %v1002, 0.0
    %v1011 = vmax.f32 %v1007, 0.0
    %v1012 = vld [vmem:[#allocation2 + $0x400] sm:$0xff]
    %v1013 = vld [vmem:[#allocation2 + $0x408] sm:$0xff]
    %v1014 = vld [vmem:[#allocation2 + $0x410] sm:$0xff]
    %v1015 = vld [vmem:[#allocation2 + $0x418] sm:$0xff]
    %v1016 = vld [vmem:[#allocation2 + $0x420] sm:$0xff]
    %v1017 = vld [vmem:[#allocation2 + $0x428] sm:$0xff]
    %v1018 = vld [vmem:[#allocation2 + $0x430] sm:$0xff]
    %v1019 = vld [vmem:[#allocation2 + $0x438] sm:$0xff]
    %v1020 = vld [vmem:[#allocation2 + $0x440] sm:$0xff]
    %v1021 = vld [vmem:[#allocation2 + $0x448] sm:$0xff]
    %v1022 = vld [vmem:[#allocation2 + $0x450] sm:$0xff]
    %v1023 = vld [vmem:[#allocation2 + $0x458] sm:$0xff]
    %v1024 = vld [vmem:[#allocation2 + $0x460] sm:$0xff]
    %v1025 = vld [vmem:[#allocation2 + $0x468] sm:$0xff]
    %v1026 = vld [vmem:[#allocation2 + $0x470] sm:$0xff]
    %v1027 = vld [vmem:[#allocation2 + $0x478] sm:$0xff]
    %v1028 = vlaneseq
    %v1029 = vshrl.u32 %v1028, 7
    %v1030 = vsub.s32 6, %v1029
    %v1031 = vrot.slane %v26, %v1030
    %1032 = vmatprep.subr.mxu0 0.0
    %1033 = vmatpush1.msra.mxu0 %v1027
    %1034 = vmatprep.subr.mxu0 0.0
    %1035 = vmatpush1.msra.mxu0 %v1026
    %1036 = vmatprep.subr.mxu0 0.0
    %1037 = vmatpush1.msra.mxu0 %v1025
    %1038 = vmatprep.subr.mxu0 0.0
    %1039 = vmatpush1.msra.mxu0 %v1024
    %1040 = vmatprep.subr.mxu0 0.0
    %1041 = vmatpush1.msra.mxu0 %v1023
    %1042 = vmatprep.subr.mxu0 0.0
    %1043 = vmatpush1.msra.mxu0 %v1022
    %1044 = vmatprep.subr.mxu0 0.0
    %1045 = vmatpush1.msra.mxu0 %v1021
    %1046 = vmatprep.subr.mxu0 0.0
    %1047 = vmatpush1.msra.mxu0 %v1020
    %1048 = vmatprep.subr.mxu0 0.0
    %1049 = vmatpush1.msra.mxu0 %v1019
    %1050 = vmatprep.subr.mxu0 0.0
    %1051 = vmatpush1.msra.mxu0 %v1018
    %1052 = vmatprep.subr.mxu0 0.0
    %1053 = vmatpush1.msra.mxu0 %v1017
    %1054 = vmatprep.subr.mxu0 0.0
    %1055 = vmatpush1.msra.mxu0 %v1016
    %1056 = vmatprep.subr.mxu0 0.0
    %1057 = vmatpush1.msra.mxu0 %v1015
    %1058 = vmatprep.subr.mxu0 0.0
    %1059 = vmatpush1.msra.mxu0 %v1014
    %1060 = vmatprep.subr.mxu0 0.0
    %1061 = vmatpush1.msra.mxu0 %v1013
    %1062 = vmatprep.subr.mxu0 0.0
    %1063 = vmatpush1.msra.mxu0 %v1012
    %1064 = vmatprep.subr.mxu0 0.0
    %1065 = vmatpush2.msra.mxu0 0.0
    %1066 = vmatprep.subr.mxu0 0.0
    %1067 = vmatpush2.msra.mxu0 0.0
    %1068 = vmatprep.subr.mxu0 0.0
    %1069 = vmatpush2.msra.mxu0 0.0
    %1070 = vmatprep.subr.mxu0 0.0
    %1071 = vmatpush2.msra.mxu0 0.0
    %1072 = vmatprep.subr.mxu0 0.0
    %1073 = vmatpush2.msra.mxu0 0.0
    %1074 = vmatprep.subr.mxu0 0.0
    %1075 = vmatpush2.msra.mxu0 0.0
    %1076 = vmatprep.subr.mxu0 0.0
    %1077 = vmatpush2.msra.mxu0 0.0
    %1078 = vmatprep.subr.mxu0 0.0
    %1079 = vmatpush2.msra.mxu0 0.0
    %1080 = vmatprep.subr.mxu0 0.0
    %1081 = vmatpush2.msra.mxu0 0.0
    %1082 = vmatprep.subr.mxu0 0.0
    %1083 = vmatpush2.msra.mxu0 0.0
    %1084 = vmatprep.subr.mxu0 0.0
    %1085 = vmatpush2.msra.mxu0 0.0
    %1086 = vmatprep.subr.mxu0 0.0
    %1087 = vmatpush2.msra.mxu0 0.0
    %1088 = vmatprep.subr.mxu0 0.0
    %1089 = vmatpush2.msra.mxu0 0.0
    %1090 = vmatprep.subr.mxu0 0.0
    %1091 = vmatpush2.msra.mxu0 0.0
    %1092 = vmatprep.subr.mxu0 0.0
    %1093 = vmatpush2.msra.mxu0 0.0
    %1094 = vmatprep.subr.mxu0 0.0
    %1095 = vmatpush2.msra.mxu0 0.0
    %1096 = vmatprep.mubr.f32.mxu0 0.0
    %1097 = vmatmul.mubr.f32.gmra.mxu0 %v1010
    %v1098 = vpop.f32.mrf.mxu0
    %v1099 = vadd.f32 %v1031, %v1098
    %v1100 = vpop.f32.mrf.mxu0
    %1101 = vmatprep.mubr.f32.mxu0 0.0
    %1102 = vmatmul.mubr.f32.gmra.mxu0 %v1011
    %v1103 = vpop.f32.mrf.mxu0
    %v1104 = vadd.f32 %v1031, %v1103
    %v1105 = vpop.f32.mrf.mxu0
    %1106 = vdwg.mxu0
    %v1107 = vadd.f32 %v913, %v1099
    %v1108 = vadd.f32 %v914, %v1104
    %1109 = vadd.xlane.f32.xlu0 %v1107
    %v1110 = vpop.xlane.xlu0 %1109
    %1111 = vadd.xlane.f32.xlu0 %v1108
    %v1112 = vpop.xlane.xlu0 %1111
    %v1113 = vmul.f32 %v1110, 0.03125
    %v1114 = vmul.f32 %v1112, 0.03125
    %v1115 = vmul.f32 %v1107, %v1107
    %v1116 = vmul.f32 %v1108, %v1108
    %1117 = vadd.xlane.f32.xlu0 %v1115
    %v1118 = vpop.xlane.xlu0 %1117
    %1119 = vadd.xlane.f32.xlu0 %v1116
    %v1120 = vpop.xlane.xlu0 %1119
    %v1121 = vmul.f32 %v1118, 0.03125
    %v1122 = vmul.f32 %v1120, 0.03125
    %v1123 = vmul.f32 %v1113, %v1113
    %v1124 = vmul.f32 %v1114, %v1114
    %v1125 = vsub.f32 %v1121, %v1123
    %v1126 = vsub.f32 %v1122, %v1124
    %v1127 = vsub.f32 %v1107, %v1113
    %v1128 = vsub.f32 %v1108, %v1114
    %v1129 = vlaneseq
    %v1130 = vshrl.u32 %v1129, 7
    %v1131 = vsub.s32 1, %v1130
    %v1132 = vrot.slane %v27, %v1131
    %v1133 = vmul.f32 %v1132, %v1127
    %v1134 = vmul.f32 %v1132, %v1128
    %v1135 = vadd.f32 %v1125, 1e-05
    %v1136 = vadd.f32 %v1126, 1e-05
    %v1137 = vrsqrt.pop %v1135
    %v1138 = vrsqrt.pop %v1136
    %v1139 = vmul.f32 %v1133, %v1137
    %v1140 = vmul.f32 %v1134, %v1138
    %v1141 = vlaneseq
    %v1142 = vshrl.u32 %v1141, 7
    %v1143 = vsub.s32 2, %v1142
    %v1144 = vrot.slane %v27, %v1143
    %v1145 = vadd.f32 %v1139, %v1144
    %v1146 = vadd.f32 %v1140, %v1144
    %v1147 = vld [vmem:[#allocation2 + $0x480] sm:$0xff]
    %v1148 = vld [vmem:[#allocation2 + $0x488] sm:$0xff]
    %v1149 = vld [vmem:[#allocation2 + $0x490] sm:$0xff]
    %v1150 = vld [vmem:[#allocation2 + $0x498] sm:$0xff]
    %v1151 = vld [vmem:[#allocation2 + $0x4a0] sm:$0xff]
    %v1152 = vld [vmem:[#allocation2 + $0x4a8] sm:$0xff]
    %v1153 = vld [vmem:[#allocation2 + $0x4b0] sm:$0xff]
    %v1154 = vld [vmem:[#allocation2 + $0x4b8] sm:$0xff]
    %v1155 = vld [vmem:[#allocation2 + $0x4c0] sm:$0xff]
    %v1156 = vld [vmem:[#allocation2 + $0x4c8] sm:$0xff]
    %v1157 = vld [vmem:[#allocation2 + $0x4d0] sm:$0xff]
    %v1158 = vld [vmem:[#allocation2 + $0x4d8] sm:$0xff]
    %v1159 = vld [vmem:[#allocation2 + $0x4e0] sm:$0xff]
    %v1160 = vld [vmem:[#allocation2 + $0x4e8] sm:$0xff]
    %v1161 = vld [vmem:[#allocation2 + $0x4f0] sm:$0xff]
    %v1162 = vld [vmem:[#allocation2 + $0x4f8] sm:$0xff]
    %v1163 = vlaneseq
    %v1164 = vshrl.u32 %v1163, 7
    %v1165 = vsub.s32 3, %v1164
    %v1166 = vrot.slane %v27, %v1165
    %1167 = vmatprep.subr.mxu0 0.0
    %1168 = vmatpush1.msra.mxu0 %v1162
    %1169 = vmatprep.subr.mxu0 0.0
    %1170 = vmatpush1.msra.mxu0 %v1161
    %1171 = vmatprep.subr.mxu0 0.0
    %1172 = vmatpush1.msra.mxu0 %v1160
    %1173 = vmatprep.subr.mxu0 0.0
    %1174 = vmatpush1.msra.mxu0 %v1159
    %1175 = vmatprep.subr.mxu0 0.0
    %1176 = vmatpush1.msra.mxu0 %v1158
    %1177 = vmatprep.subr.mxu0 0.0
    %1178 = vmatpush1.msra.mxu0 %v1157
    %1179 = vmatprep.subr.mxu0 0.0
    %1180 = vmatpush1.msra.mxu0 %v1156
    %1181 = vmatprep.subr.mxu0 0.0
    %1182 = vmatpush1.msra.mxu0 %v1155
    %1183 = vmatprep.subr.mxu0 0.0
    %1184 = vmatpush1.msra.mxu0 %v1154
    %1185 = vmatprep.subr.mxu0 0.0
    %1186 = vmatpush1.msra.mxu0 %v1153
    %1187 = vmatprep.subr.mxu0 0.0
    %1188 = vmatpush1.msra.mxu0 %v1152
    %1189 = vmatprep.subr.mxu0 0.0
    %1190 = vmatpush1.msra.mxu0 %v1151
    %1191 = vmatprep.subr.mxu0 0.0
    %1192 = vmatpush1.msra.mxu0 %v1150
    %1193 = vmatprep.subr.mxu0 0.0
    %1194 = vmatpush1.msra.mxu0 %v1149
    %1195 = vmatprep.subr.mxu0 0.0
    %1196 = vmatpush1.msra.mxu0 %v1148
    %1197 = vmatprep.subr.mxu0 0.0
    %1198 = vmatpush1.msra.mxu0 %v1147
    %1199 = vmatprep.subr.mxu0 0.0
    %1200 = vmatpush2.msra.mxu0 0.0
    %1201 = vmatprep.subr.mxu0 0.0
    %1202 = vmatpush2.msra.mxu0 0.0
    %1203 = vmatprep.subr.mxu0 0.0
    %1204 = vmatpush2.msra.mxu0 0.0
    %1205 = vmatprep.subr.mxu0 0.0
    %1206 = vmatpush2.msra.mxu0 0.0
    %1207 = vmatprep.subr.mxu0 0.0
    %1208 = vmatpush2.msra.mxu0 0.0
    %1209 = vmatprep.subr.mxu0 0.0
    %1210 = vmatpush2.msra.mxu0 0.0
    %1211 = vmatprep.subr.mxu0 0.0
    %1212 = vmatpush2.msra.mxu0 0.0
    %1213 = vmatprep.subr.mxu0 0.0
    %1214 = vmatpush2.msra.mxu0 0.0
    %1215 = vmatprep.subr.mxu0 0.0
    %1216 = vmatpush2.msra.mxu0 0.0
    %1217 = vmatprep.subr.mxu0 0.0
    %1218 = vmatpush2.msra.mxu0 0.0
    %1219 = vmatprep.subr.mxu0 0.0
    %1220 = vmatpush2.msra.mxu0 0.0
    %1221 = vmatprep.subr.mxu0 0.0
    %1222 = vmatpush2.msra.mxu0 0.0
    %1223 = vmatprep.subr.mxu0 0.0
    %1224 = vmatpush2.msra.mxu0 0.0
    %1225 = vmatprep.subr.mxu0 0.0
    %1226 = vmatpush2.msra.mxu0 0.0
    %1227 = vmatprep.subr.mxu0 0.0
    %1228 = vmatpush2.msra.mxu0 0.0
    %1229 = vmatprep.subr.mxu0 0.0
    %1230 = vmatpush2.msra.mxu0 0.0
    %1231 = vmatprep.mubr.f32.mxu0 0.0
    %1232 = vmatmul.mubr.f32.gmra.mxu0 %v1145
    %v1233 = vpop.f32.mrf.mxu0
    %v1234 = vadd.f32 %v1166, %v1233
    %v1235 = vpop.f32.mrf.mxu0
    %1236 = vmatprep.mubr.f32.mxu0 0.0
    %1237 = vmatmul.mubr.f32.gmra.mxu0 %v1146
    %v1238 = vpop.f32.mrf.mxu0
    %v1239 = vadd.f32 %v1166, %v1238
    %v1240 = vpop.f32.mrf.mxu0
    %1241 = vdwg.mxu0
    %v1242 = vld [vmem:[#allocation2 + $0x500] sm:$0xff]
    %v1243 = vld [vmem:[#allocation2 + $0x508] sm:$0xff]
    %v1244 = vld [vmem:[#allocation2 + $0x510] sm:$0xff]
    %v1245 = vld [vmem:[#allocation2 + $0x518] sm:$0xff]
    %v1246 = vld [vmem:[#allocation2 + $0x520] sm:$0xff]
    %v1247 = vld [vmem:[#allocation2 + $0x528] sm:$0xff]
    %v1248 = vld [vmem:[#allocation2 + $0x530] sm:$0xff]
    %v1249 = vld [vmem:[#allocation2 + $0x538] sm:$0xff]
    %v1250 = vld [vmem:[#allocation2 + $0x540] sm:$0xff]
    %v1251 = vld [vmem:[#allocation2 + $0x548] sm:$0xff]
    %v1252 = vld [vmem:[#allocation2 + $0x550] sm:$0xff]
    %v1253 = vld [vmem:[#allocation2 + $0x558] sm:$0xff]
    %v1254 = vld [vmem:[#allocation2 + $0x560] sm:$0xff]
    %v1255 = vld [vmem:[#allocation2 + $0x568] sm:$0xff]
    %v1256 = vld [vmem:[#allocation2 + $0x570] sm:$0xff]
    %v1257 = vld [vmem:[#allocation2 + $0x578] sm:$0xff]
    %v1258 = vlaneseq
    %v1259 = vshrl.u32 %v1258, 7
    %v1260 = vsub.s32 4, %v1259
    %v1261 = vrot.slane %v27, %v1260
    %1262 = vmatprep.subr.mxu0 0.0
    %1263 = vmatpush1.msra.mxu0 %v1257
    %1264 = vmatprep.subr.mxu0 0.0
    %1265 = vmatpush1.msra.mxu0 %v1256
    %1266 = vmatprep.subr.mxu0 0.0
    %1267 = vmatpush1.msra.mxu0 %v1255
    %1268 = vmatprep.subr.mxu0 0.0
    %1269 = vmatpush1.msra.mxu0 %v1254
    %1270 = vmatprep.subr.mxu0 0.0
    %1271 = vmatpush1.msra.mxu0 %v1253
    %1272 = vmatprep.subr.mxu0 0.0
    %1273 = vmatpush1.msra.mxu0 %v1252
    %1274 = vmatprep.subr.mxu0 0.0
    %1275 = vmatpush1.msra.mxu0 %v1251
    %1276 = vmatprep.subr.mxu0 0.0
    %1277 = vmatpush1.msra.mxu0 %v1250
    %1278 = vmatprep.subr.mxu0 0.0
    %1279 = vmatpush1.msra.mxu0 %v1249
    %1280 = vmatprep.subr.mxu0 0.0
    %1281 = vmatpush1.msra.mxu0 %v1248
    %1282 = vmatprep.subr.mxu0 0.0
    %1283 = vmatpush1.msra.mxu0 %v1247
    %1284 = vmatprep.subr.mxu0 0.0
    %1285 = vmatpush1.msra.mxu0 %v1246
    %1286 = vmatprep.subr.mxu0 0.0
    %1287 = vmatpush1.msra.mxu0 %v1245
    %1288 = vmatprep.subr.mxu0 0.0
    %1289 = vmatpush1.msra.mxu0 %v1244
    %1290 = vmatprep.subr.mxu0 0.0
    %1291 = vmatpush1.msra.mxu0 %v1243
    %1292 = vmatprep.subr.mxu0 0.0
    %1293 = vmatpush1.msra.mxu0 %v1242
    %1294 = vmatprep.subr.mxu0 0.0
    %1295 = vmatpush2.msra.mxu0 0.0
    %1296 = vmatprep.subr.mxu0 0.0
    %1297 = vmatpush2.msra.mxu0 0.0
    %1298 = vmatprep.subr.mxu0 0.0
    %1299 = vmatpush2.msra.mxu0 0.0
    %1300 = vmatprep.subr.mxu0 0.0
    %1301 = vmatpush2.msra.mxu0 0.0
    %1302 = vmatprep.subr.mxu0 0.0
    %1303 = vmatpush2.msra.mxu0 0.0
    %1304 = vmatprep.subr.mxu0 0.0
    %1305 = vmatpush2.msra.mxu0 0.0
    %1306 = vmatprep.subr.mxu0 0.0
    %1307 = vmatpush2.msra.mxu0 0.0
    %1308 = vmatprep.subr.mxu0 0.0
    %1309 = vmatpush2.msra.mxu0 0.0
    %1310 = vmatprep.subr.mxu0 0.0
    %1311 = vmatpush2.msra.mxu0 0.0
    %1312 = vmatprep.subr.mxu0 0.0
    %1313 = vmatpush2.msra.mxu0 0.0
    %1314 = vmatprep.subr.mxu0 0.0
    %1315 = vmatpush2.msra.mxu0 0.0
    %1316 = vmatprep.subr.mxu0 0.0
    %1317 = vmatpush2.msra.mxu0 0.0
    %1318 = vmatprep.subr.mxu0 0.0
    %1319 = vmatpush2.msra.mxu0 0.0
    %1320 = vmatprep.subr.mxu0 0.0
    %1321 = vmatpush2.msra.mxu0 0.0
    %1322 = vmatprep.subr.mxu0 0.0
    %1323 = vmatpush2.msra.mxu0 0.0
    %1324 = vmatprep.subr.mxu0 0.0
    %1325 = vmatpush2.msra.mxu0 0.0
    %1326 = vmatprep.mubr.f32.mxu0 0.0
    %1327 = vmatmul.mubr.f32.gmra.mxu0 %v1145
    %v1328 = vpop.f32.mrf.mxu0
    %v1329 = vadd.f32 %v1261, %v1328
    %v1330 = vpop.f32.mrf.mxu0
    %1331 = vmatprep.mubr.f32.mxu0 0.0
    %1332 = vmatmul.mubr.f32.gmra.mxu0 %v1146
    %v1333 = vpop.f32.mrf.mxu0
    %v1334 = vadd.f32 %v1261, %v1333
    %v1335 = vpop.f32.mrf.mxu0
    %1336 = vdwg.mxu0
    %v1337 = vld [vmem:[#allocation2 + $0x580] sm:$0xff]
    %v1338 = vld [vmem:[#allocation2 + $0x588] sm:$0xff]
    %v1339 = vld [vmem:[#allocation2 + $0x590] sm:$0xff]
    %v1340 = vld [vmem:[#allocation2 + $0x598] sm:$0xff]
    %v1341 = vld [vmem:[#allocation2 + $0x5a0] sm:$0xff]
    %v1342 = vld [vmem:[#allocation2 + $0x5a8] sm:$0xff]
    %v1343 = vld [vmem:[#allocation2 + $0x5b0] sm:$0xff]
    %v1344 = vld [vmem:[#allocation2 + $0x5b8] sm:$0xff]
    %v1345 = vld [vmem:[#allocation2 + $0x5c0] sm:$0xff]
    %v1346 = vld [vmem:[#allocation2 + $0x5c8] sm:$0xff]
    %v1347 = vld [vmem:[#allocation2 + $0x5d0] sm:$0xff]
    %v1348 = vld [vmem:[#allocation2 + $0x5d8] sm:$0xff]
    %v1349 = vld [vmem:[#allocation2 + $0x5e0] sm:$0xff]
    %v1350 = vld [vmem:[#allocation2 + $0x5e8] sm:$0xff]
    %v1351 = vld [vmem:[#allocation2 + $0x5f0] sm:$0xff]
    %v1352 = vld [vmem:[#allocation2 + $0x5f8] sm:$0xff]
    %v1353 = vlaneseq
    %v1354 = vshrl.u32 %v1353, 7
    %v1355 = vsub.s32 5, %v1354
    %v1356 = vrot.slane %v27, %v1355
    %1357 = vmatprep.subr.mxu0 0.0
    %1358 = vmatpush1.msra.mxu0 %v1352
    %1359 = vmatprep.subr.mxu0 0.0
    %1360 = vmatpush1.msra.mxu0 %v1351
    %1361 = vmatprep.subr.mxu0 0.0
    %1362 = vmatpush1.msra.mxu0 %v1350
    %1363 = vmatprep.subr.mxu0 0.0
    %1364 = vmatpush1.msra.mxu0 %v1349
    %1365 = vmatprep.subr.mxu0 0.0
    %1366 = vmatpush1.msra.mxu0 %v1348
    %1367 = vmatprep.subr.mxu0 0.0
    %1368 = vmatpush1.msra.mxu0 %v1347
    %1369 = vmatprep.subr.mxu0 0.0
    %1370 = vmatpush1.msra.mxu0 %v1346
    %1371 = vmatprep.subr.mxu0 0.0
    %1372 = vmatpush1.msra.mxu0 %v1345
    %1373 = vmatprep.subr.mxu0 0.0
    %1374 = vmatpush1.msra.mxu0 %v1344
    %1375 = vmatprep.subr.mxu0 0.0
    %1376 = vmatpush1.msra.mxu0 %v1343
    %1377 = vmatprep.subr.mxu0 0.0
    %1378 = vmatpush1.msra.mxu0 %v1342
    %1379 = vmatprep.subr.mxu0 0.0
    %1380 = vmatpush1.msra.mxu0 %v1341
    %1381 = vmatprep.subr.mxu0 0.0
    %1382 = vmatpush1.msra.mxu0 %v1340
    %1383 = vmatprep.subr.mxu0 0.0
    %1384 = vmatpush1.msra.mxu0 %v1339
    %1385 = vmatprep.subr.mxu0 0.0
    %1386 = vmatpush1.msra.mxu0 %v1338
    %1387 = vmatprep.subr.mxu0 0.0
    %1388 = vmatpush1.msra.mxu0 %v1337
    %1389 = vmatprep.subr.mxu0 0.0
    %1390 = vmatpush2.msra.mxu0 0.0
    %1391 = vmatprep.subr.mxu0 0.0
    %1392 = vmatpush2.msra.mxu0 0.0
    %1393 = vmatprep.subr.mxu0 0.0
    %1394 = vmatpush2.msra.mxu0 0.0
    %1395 = vmatprep.subr.mxu0 0.0
    %1396 = vmatpush2.msra.mxu0 0.0
    %1397 = vmatprep.subr.mxu0 0.0
    %1398 = vmatpush2.msra.mxu0 0.0
    %1399 = vmatprep.subr.mxu0 0.0
    %1400 = vmatpush2.msra.mxu0 0.0
    %1401 = vmatprep.subr.mxu0 0.0
    %1402 = vmatpush2.msra.mxu0 0.0
    %1403 = vmatprep.subr.mxu0 0.0
    %1404 = vmatpush2.msra.mxu0 0.0
    %1405 = vmatprep.subr.mxu0 0.0
    %1406 = vmatpush2.msra.mxu0 0.0
    %1407 = vmatprep.subr.mxu0 0.0
    %1408 = vmatpush2.msra.mxu0 0.0
    %1409 = vmatprep.subr.mxu0 0.0
    %1410 = vmatpush2.msra.mxu0 0.0
    %1411 = vmatprep.subr.mxu0 0.0
    %1412 = vmatpush2.msra.mxu0 0.0
    %1413 = vmatprep.subr.mxu0 0.0
    %1414 = vmatpush2.msra.mxu0 0.0
    %1415 = vmatprep.subr.mxu0 0.0
    %1416 = vmatpush2.msra.mxu0 0.0
    %1417 = vmatprep.subr.mxu0 0.0
    %1418 = vmatpush2.msra.mxu0 0.0
    %1419 = vmatprep.subr.mxu0 0.0
    %1420 = vmatpush2.msra.mxu0 0.0
    %1421 = vmatprep.mubr.f32.mxu0 0.0
    %1422 = vmatmul.mubr.f32.gmra.mxu0 %v1145
    %v1423 = vpop.f32.mrf.mxu0
    %v1424 = vadd.f32 %v1356, %v1423
    %v1425 = vpop.f32.mrf.mxu0
    %1426 = vmatprep.mubr.f32.mxu0 0.0
    %1427 = vmatmul.mubr.f32.gmra.mxu0 %v1146
    %v1428 = vpop.f32.mrf.mxu0
    %v1429 = vadd.f32 %v1356, %v1428
    %v1430 = vpop.f32.mrf.mxu0
    %1431 = vdwg.mxu0
    %1432 = vmatprep.subr.mxu0 0.0
    %1433 = vmatpush1.xpose.msra.mxu0 0.0
    %1434 = vmatprep.subr.mxu0 0.0
    %1435 = vmatpush1.xpose.msra.mxu0 0.0
    %1436 = vmatprep.subr.mxu0 0.0
    %1437 = vmatpush1.xpose.msra.mxu0 0.0
    %1438 = vmatprep.subr.mxu0 0.0
    %1439 = vmatpush1.xpose.msra.mxu0 0.0
    %1440 = vmatprep.subr.mxu0 0.0
    %1441 = vmatpush1.xpose.msra.mxu0 0.0
    %1442 = vmatprep.subr.mxu0 0.0
    %1443 = vmatpush1.xpose.msra.mxu0 0.0
    %1444 = vmatprep.subr.mxu0 0.0
    %1445 = vmatpush1.xpose.msra.mxu0 0.0
    %1446 = vmatprep.subr.mxu0 0.0
    %1447 = vmatpush1.xpose.msra.mxu0 0.0
    %1448 = vmatprep.subr.mxu0 0.0
    %1449 = vmatpush1.xpose.msra.mxu0 0.0
    %1450 = vmatprep.subr.mxu0 0.0
    %1451 = vmatpush1.xpose.msra.mxu0 0.0
    %1452 = vmatprep.subr.mxu0 0.0
    %1453 = vmatpush1.xpose.msra.mxu0 0.0
    %1454 = vmatprep.subr.mxu0 0.0
    %1455 = vmatpush1.xpose.msra.mxu0 0.0
    %1456 = vmatprep.subr.mxu0 0.0
    %1457 = vmatpush1.xpose.msra.mxu0 0.0
    %1458 = vmatprep.subr.mxu0 0.0
    %1459 = vmatpush1.xpose.msra.mxu0 0.0
    %1460 = vmatprep.subr.mxu0 0.0
    %1461 = vmatpush1.xpose.msra.mxu0 0.0
    %1462 = vmatprep.subr.mxu0 0.0
    %1463 = vmatpush1.xpose.msra.mxu0 %v1329
    %1464 = vmatprep.subr.mxu0 0.0
    %1465 = vmatpush2.xpose.msra.mxu0 0.0
    %1466 = vmatprep.subr.mxu0 0.0
    %1467 = vmatpush2.xpose.msra.mxu0 0.0
    %1468 = vmatprep.subr.mxu0 0.0
    %1469 = vmatpush2.xpose.msra.mxu0 0.0
    %1470 = vmatprep.subr.mxu0 0.0
    %1471 = vmatpush2.xpose.msra.mxu0 0.0
    %1472 = vmatprep.subr.mxu0 0.0
    %1473 = vmatpush2.xpose.msra.mxu0 0.0
    %1474 = vmatprep.subr.mxu0 0.0
    %1475 = vmatpush2.xpose.msra.mxu0 0.0
    %1476 = vmatprep.subr.mxu0 0.0
    %1477 = vmatpush2.xpose.msra.mxu0 0.0
    %1478 = vmatprep.subr.mxu0 0.0
    %1479 = vmatpush2.xpose.msra.mxu0 0.0
    %1480 = vmatprep.subr.mxu0 0.0
    %1481 = vmatpush2.xpose.msra.mxu0 0.0
    %1482 = vmatprep.subr.mxu0 0.0
    %1483 = vmatpush2.xpose.msra.mxu0 0.0
    %1484 = vmatprep.subr.mxu0 0.0
    %1485 = vmatpush2.xpose.msra.mxu0 0.0
    %1486 = vmatprep.subr.mxu0 0.0
    %1487 = vmatpush2.xpose.msra.mxu0 0.0
    %1488 = vmatprep.subr.mxu0 0.0
    %1489 = vmatpush2.xpose.msra.mxu0 0.0
    %1490 = vmatprep.subr.mxu0 0.0
    %1491 = vmatpush2.xpose.msra.mxu0 0.0
    %1492 = vmatprep.subr.mxu0 0.0
    %1493 = vmatpush2.xpose.msra.mxu0 0.0
    %1494 = vmatprep.subr.mxu0 0.0
    %1495 = vmatpush2.xpose.msra.mxu0 0.0
    %1496 = vmatprep.mubr.f32.mxu0 0.0
    %1497 = vmatmul.mubr.f32.gmra.mxu0 %v1234
    %v1498 = vpop.f32.mrf.mxu0
    %v1499 = vadd.f32 0.0, %v1498
    %v1500 = vpop.f32.mrf.mxu0
    %1501 = vdwg.mxu0
    %1502 = vmatprep.subr.mxu0 0.0
    %1503 = vmatpush1.xpose.msra.mxu0 0.0
    %1504 = vmatprep.subr.mxu0 0.0
    %1505 = vmatpush1.xpose.msra.mxu0 0.0
    %1506 = vmatprep.subr.mxu0 0.0
    %1507 = vmatpush1.xpose.msra.mxu0 0.0
    %1508 = vmatprep.subr.mxu0 0.0
    %1509 = vmatpush1.xpose.msra.mxu0 0.0
    %1510 = vmatprep.subr.mxu0 0.0
    %1511 = vmatpush1.xpose.msra.mxu0 0.0
    %1512 = vmatprep.subr.mxu0 0.0
    %1513 = vmatpush1.xpose.msra.mxu0 0.0
    %1514 = vmatprep.subr.mxu0 0.0
    %1515 = vmatpush1.xpose.msra.mxu0 0.0
    %1516 = vmatprep.subr.mxu0 0.0
    %1517 = vmatpush1.xpose.msra.mxu0 0.0
    %1518 = vmatprep.subr.mxu0 0.0
    %1519 = vmatpush1.xpose.msra.mxu0 0.0
    %1520 = vmatprep.subr.mxu0 0.0
    %1521 = vmatpush1.xpose.msra.mxu0 0.0
    %1522 = vmatprep.subr.mxu0 0.0
    %1523 = vmatpush1.xpose.msra.mxu0 0.0
    %1524 = vmatprep.subr.mxu0 0.0
    %1525 = vmatpush1.xpose.msra.mxu0 0.0
    %1526 = vmatprep.subr.mxu0 0.0
    %1527 = vmatpush1.xpose.msra.mxu0 0.0
    %1528 = vmatprep.subr.mxu0 0.0
    %1529 = vmatpush1.xpose.msra.mxu0 0.0
    %1530 = vmatprep.subr.mxu0 0.0
    %1531 = vmatpush1.xpose.msra.mxu0 0.0
    %1532 = vmatprep.subr.mxu0 0.0
    %1533 = vmatpush1.xpose.msra.mxu0 %v1334
    %1534 = vmatprep.subr.mxu0 0.0
    %1535 = vmatpush2.xpose.msra.mxu0 0.0
    %1536 = vmatprep.subr.mxu0 0.0
    %1537 = vmatpush2.xpose.msra.mxu0 0.0
    %1538 = vmatprep.subr.mxu0 0.0
    %1539 = vmatpush2.xpose.msra.mxu0 0.0
    %1540 = vmatprep.subr.mxu0 0.0
    %1541 = vmatpush2.xpose.msra.mxu0 0.0
    %1542 = vmatprep.subr.mxu0 0.0
    %1543 = vmatpush2.xpose.msra.mxu0 0.0
    %1544 = vmatprep.subr.mxu0 0.0
    %1545 = vmatpush2.xpose.msra.mxu0 0.0
    %1546 = vmatprep.subr.mxu0 0.0
    %1547 = vmatpush2.xpose.msra.mxu0 0.0
    %1548 = vmatprep.subr.mxu0 0.0
    %1549 = vmatpush2.xpose.msra.mxu0 0.0
    %1550 = vmatprep.subr.mxu0 0.0
    %1551 = vmatpush2.xpose.msra.mxu0 0.0
    %1552 = vmatprep.subr.mxu0 0.0
    %1553 = vmatpush2.xpose.msra.mxu0 0.0
    %1554 = vmatprep.subr.mxu0 0.0
    %1555 = vmatpush2.xpose.msra.mxu0 0.0
    %1556 = vmatprep.subr.mxu0 0.0
    %1557 = vmatpush2.xpose.msra.mxu0 0.0
    %1558 = vmatprep.subr.mxu0 0.0
    %1559 = vmatpush2.xpose.msra.mxu0 0.0
    %1560 = vmatprep.subr.mxu0 0.0
    %1561 = vmatpush2.xpose.msra.mxu0 0.0
    %1562 = vmatprep.subr.mxu0 0.0
    %1563 = vmatpush2.xpose.msra.mxu0 0.0
    %1564 = vmatprep.subr.mxu0 0.0
    %1565 = vmatpush2.xpose.msra.mxu0 0.0
    %1566 = vmatprep.mubr.f32.mxu0 0.0
    %1567 = vmatmul.mubr.f32.gmra.mxu0 %v1239
    %v1568 = vpop.f32.mrf.mxu0
    %v1569 = vadd.f32 0.0, %v1568
    %v1570 = vpop.f32.mrf.mxu0
    %1571 = vdwg.mxu0
    %v1572 = vmul.f32 %v1499, 0.17677669
    %v1573 = vmul.f32 %v1569, 0.17677669
    %vm1574 = vcmask 64512
    %v1575 = vsel %vm1574, %v1572, -inf
    %1576 = vmax.xlane.f32.xlu0 %v1575
    %v1577 = vpop.xlane.xlu0 %1576
    %v1578 = vsel %vm1574, %v1573, -inf
    %1579 = vmax.xlane.f32.xlu0 %v1578
    %v1580 = vpop.xlane.xlu0 %1579
    %v1581 = vsub.f32 %v1572, %v1577
    %v1582 = vsub.f32 %v1573, %v1580
    %v1583 = vmul.f32 %v1581, 1.442695
    %v1584 = vpow.pop %v1583
    %v1585 = vmul.f32 %v1582, 1.442695
    %v1586 = vpow.pop %v1585
    %v1587 = vsel %vm1574, %v1584, 0.0
    %1588 = vadd.xlane.f32.xlu0 %v1587
    %v1589 = vpop.xlane.xlu0 %1588
    %v1590 = vsel %vm1574, %v1586, 0.0
    %1591 = vadd.xlane.f32.xlu0 %v1590
    %v1592 = vpop.xlane.xlu0 %1591
    %v1593 = vrcp.pop %v1589
    %v1594 = vrcp.pop %v1592
    %v1595 = vmul.f32 %v1584, %v1593
    %v1596 = vmul.f32 %v1586, %v1594
    %v1598 = vsel %vm1574, %v1595, 0
    %1600 = vmatprep.subr.mxu0 0.0
    %1601 = vmatpush1.msra.mxu0 0.0
    %1602 = vmatprep.subr.mxu0 0.0
    %1603 = vmatpush1.msra.mxu0 0.0
    %1604 = vmatprep.subr.mxu0 0.0
    %1605 = vmatpush1.msra.mxu0 0.0
    %1606 = vmatprep.subr.mxu0 0.0
    %1607 = vmatpush1.msra.mxu0 0.0
    %1608 = vmatprep.subr.mxu0 0.0
    %1609 = vmatpush1.msra.mxu0 0.0
    %1610 = vmatprep.subr.mxu0 0.0
    %1611 = vmatpush1.msra.mxu0 0.0
    %1612 = vmatprep.subr.mxu0 0.0
    %1613 = vmatpush1.msra.mxu0 0.0
    %1614 = vmatprep.subr.mxu0 0.0
    %1615 = vmatpush1.msra.mxu0 0.0
    %1616 = vmatprep.subr.mxu0 0.0
    %1617 = vmatpush1.msra.mxu0 0.0
    %1618 = vmatprep.subr.mxu0 0.0
    %1619 = vmatpush1.msra.mxu0 0.0
    %1620 = vmatprep.subr.mxu0 0.0
    %1621 = vmatpush1.msra.mxu0 0.0
    %1622 = vmatprep.subr.mxu0 0.0
    %1623 = vmatpush1.msra.mxu0 0.0
    %1624 = vmatprep.subr.mxu0 0.0
    %1625 = vmatpush1.msra.mxu0 0.0
    %1626 = vmatprep.subr.mxu0 0.0
    %1627 = vmatpush1.msra.mxu0 0.0
    %1628 = vmatprep.subr.mxu0 0.0
    %1629 = vmatpush1.msra.mxu0 0.0
    %1630 = vmatprep.subr.mxu0 0.0
    %1631 = vmatpush1.msra.mxu0 %v1424
    %1632 = vmatprep.subr.mxu0 0.0
    %1633 = vmatpush2.msra.mxu0 0.0
    %1634 = vmatprep.subr.mxu0 0.0
    %1635 = vmatpush2.msra.mxu0 0.0
    %1636 = vmatprep.subr.mxu0 0.0
    %1637 = vmatpush2.msra.mxu0 0.0
    %1638 = vmatprep.subr.mxu0 0.0
    %1639 = vmatpush2.msra.mxu0 0.0
    %1640 = vmatprep.subr.mxu0 0.0
    %1641 = vmatpush2.msra.mxu0 0.0
    %1642 = vmatprep.subr.mxu0 0.0
    %1643 = vmatpush2.msra.mxu0 0.0
    %1644 = vmatprep.subr.mxu0 0.0
    %1645 = vmatpush2.msra.mxu0 0.0
    %1646 = vmatprep.subr.mxu0 0.0
    %1647 = vmatpush2.msra.mxu0 0.0
    %1648 = vmatprep.subr.mxu0 0.0
    %1649 = vmatpush2.msra.mxu0 0.0
    %1650 = vmatprep.subr.mxu0 0.0
    %1651 = vmatpush2.msra.mxu0 0.0
    %1652 = vmatprep.subr.mxu0 0.0
    %1653 = vmatpush2.msra.mxu0 0.0
    %1654 = vmatprep.subr.mxu0 0.0
    %1655 = vmatpush2.msra.mxu0 0.0
    %1656 = vmatprep.subr.mxu0 0.0
    %1657 = vmatpush2.msra.mxu0 0.0
    %1658 = vmatprep.subr.mxu0 0.0
    %1659 = vmatpush2.msra.mxu0 0.0
    %1660 = vmatprep.subr.mxu0 0.0
    %1661 = vmatpush2.msra.mxu0 0.0
    %1662 = vmatprep.subr.mxu0 0.0
    %1663 = vmatpush2.msra.mxu0 0.0
    %1664 = vmatprep.mubr.f32.mxu0 0.0
    %1665 = vmatmul.mubr.f32.gmra.mxu0 %v1598
    %v1666 = vpop.f32.mrf.mxu0
    %v1667 = vadd.f32 0.0, %v1666
    %v1668 = vpop.f32.mrf.mxu0
    %1669 = vdwg.mxu0
    %v1671 = vsel %vm1574, %v1596, 0
    %1673 = vmatprep.subr.mxu0 0.0
    %1674 = vmatpush1.msra.mxu0 0.0
    %1675 = vmatprep.subr.mxu0 0.0
    %1676 = vmatpush1.msra.mxu0 0.0
    %1677 = vmatprep.subr.mxu0 0.0
    %1678 = vmatpush1.msra.mxu0 0.0
    %1679 = vmatprep.subr.mxu0 0.0
    %1680 = vmatpush1.msra.mxu0 0.0
    %1681 = vmatprep.subr.mxu0 0.0
    %1682 = vmatpush1.msra.mxu0 0.0
    %1683 = vmatprep.subr.mxu0 0.0
    %1684 = vmatpush1.msra.mxu0 0.0
    %1685 = vmatprep.subr.mxu0 0.0
    %1686 = vmatpush1.msra.mxu0 0.0
    %1687 = vmatprep.subr.mxu0 0.0
    %1688 = vmatpush1.msra.mxu0 0.0
    %1689 = vmatprep.subr.mxu0 0.0
    %1690 = vmatpush1.msra.mxu0 0.0
    %1691 = vmatprep.subr.mxu0 0.0
    %1692 = vmatpush1.msra.mxu0 0.0
    %1693 = vmatprep.subr.mxu0 0.0
    %1694 = vmatpush1.msra.mxu0 0.0
    %1695 = vmatprep.subr.mxu0 0.0
    %1696 = vmatpush1.msra.mxu0 0.0
    %1697 = vmatprep.subr.mxu0 0.0
    %1698 = vmatpush1.msra.mxu0 0.0
    %1699 = vmatprep.subr.mxu0 0.0
    %1700 = vmatpush1.msra.mxu0 0.0
    %1701 = vmatprep.subr.mxu0 0.0
    %1702 = vmatpush1.msra.mxu0 0.0
    %1703 = vmatprep.subr.mxu0 0.0
    %1704 = vmatpush1.msra.mxu0 %v1429
    %1705 = vmatprep.subr.mxu0 0.0
    %1706 = vmatpush2.msra.mxu0 0.0
    %1707 = vmatprep.subr.mxu0 0.0
    %1708 = vmatpush2.msra.mxu0 0.0
    %1709 = vmatprep.subr.mxu0 0.0
    %1710 = vmatpush2.msra.mxu0 0.0
    %1711 = vmatprep.subr.mxu0 0.0
    %1712 = vmatpush2.msra.mxu0 0.0
    %1713 = vmatprep.subr.mxu0 0.0
    %1714 = vmatpush2.msra.mxu0 0.0
    %1715 = vmatprep.subr.mxu0 0.0
    %1716 = vmatpush2.msra.mxu0 0.0
    %1717 = vmatprep.subr.mxu0 0.0
    %1718 = vmatpush2.msra.mxu0 0.0
    %1719 = vmatprep.subr.mxu0 0.0
    %1720 = vmatpush2.msra.mxu0 0.0
    %1721 = vmatprep.subr.mxu0 0.0
    %1722 = vmatpush2.msra.mxu0 0.0
    %1723 = vmatprep.subr.mxu0 0.0
    %1724 = vmatpush2.msra.mxu0 0.0
    %1725 = vmatprep.subr.mxu0 0.0
    %1726 = vmatpush2.msra.mxu0 0.0
    %1727 = vmatprep.subr.mxu0 0.0
    %1728 = vmatpush2.msra.mxu0 0.0
    %1729 = vmatprep.subr.mxu0 0.0
    %1730 = vmatpush2.msra.mxu0 0.0
    %1731 = vmatprep.subr.mxu0 0.0
    %1732 = vmatpush2.msra.mxu0 0.0
    %1733 = vmatprep.subr.mxu0 0.0
    %1734 = vmatpush2.msra.mxu0 0.0
    %1735 = vmatprep.subr.mxu0 0.0
    %1736 = vmatpush2.msra.mxu0 0.0
    %1737 = vmatprep.mubr.f32.mxu0 0.0
    %1738 = vmatmul.mubr.f32.gmra.mxu0 %v1671
    %v1739 = vpop.f32.mrf.mxu0
    %v1740 = vadd.f32 0.0, %v1739
    %v1741 = vpop.f32.mrf.mxu0
    %1742 = vdwg.mxu0
    %v1743 = vrot.slane %v1667, 4
    %v1744 = vadd.f32 %v1667, %v1743
    %v1745 = vrot.slane %v1744, 2
    %v1746 = vadd.f32 %v1744, %v1745
    %v1747 = vrot.slane %v1746, 1
    %v1748 = vadd.f32 %v1746, %v1747
    %v1749 = vrot.slane %v1740, 4
    %v1750 = vadd.f32 %v1740, %v1749
    %v1751 = vrot.slane %v1750, 2
    %v1752 = vadd.f32 %v1750, %v1751
    %v1753 = vrot.slane %v1752, 1
    %v1754 = vadd.f32 %v1752, %v1753
    %v1755 = vmul.f32 %v1748, 0.125
    %v1756 = vmul.f32 %v1754, 0.125
    %v1757 = vld [vmem:[#allocation2 + $0x600] sm:$0xff]
    %v1758 = vld [vmem:[#allocation2 + $0x608] sm:$0xff]
    %v1759 = vld [vmem:[#allocation2 + $0x610] sm:$0xff]
    %v1760 = vld [vmem:[#allocation2 + $0x618] sm:$0xff]
    %v1761 = vld [vmem:[#allocation2 + $0x620] sm:$0xff]
    %v1762 = vld [vmem:[#allocation2 + $0x628] sm:$0xff]
    %v1763 = vld [vmem:[#allocation2 + $0x630] sm:$0xff]
    %v1764 = vld [vmem:[#allocation2 + $0x638] sm:$0xff]
    %v1765 = vld [vmem:[#allocation2 + $0x640] sm:$0xff]
    %v1766 = vld [vmem:[#allocation2 + $0x648] sm:$0xff]
    %v1767 = vld [vmem:[#allocation2 + $0x650] sm:$0xff]
    %v1768 = vld [vmem:[#allocation2 + $0x658] sm:$0xff]
    %v1769 = vld [vmem:[#allocation2 + $0x660] sm:$0xff]
    %v1770 = vld [vmem:[#allocation2 + $0x668] sm:$0xff]
    %v1771 = vld [vmem:[#allocation2 + $0x670] sm:$0xff]
    %v1772 = vld [vmem:[#allocation2 + $0x678] sm:$0xff]
    %v1773 = vlaneseq
    %v1774 = vshrl.u32 %v1773, 7
    %v1775 = vsub.s32 6, %v1774
    %v1776 = vrot.slane %v27, %v1775
    %vm1779 = vcmask 1041409
    %v1780 = vsel %vm1779, %v1756, %v1755
    %1782 = vmatprep.subr.mxu0 0.0
    %1783 = vmatpush1.msra.mxu0 %v1772
    %1784 = vmatprep.subr.mxu0 0.0
    %1785 = vmatpush1.msra.mxu0 %v1771
    %1786 = vmatprep.subr.mxu0 0.0
    %1787 = vmatpush1.msra.mxu0 %v1770
    %1788 = vmatprep.subr.mxu0 0.0
    %1789 = vmatpush1.msra.mxu0 %v1769
    %1790 = vmatprep.subr.mxu0 0.0
    %1791 = vmatpush1.msra.mxu0 %v1768
    %1792 = vmatprep.subr.mxu0 0.0
    %1793 = vmatpush1.msra.mxu0 %v1767
    %1794 = vmatprep.subr.mxu0 0.0
    %1795 = vmatpush1.msra.mxu0 %v1766
    %1796 = vmatprep.subr.mxu0 0.0
    %1797 = vmatpush1.msra.mxu0 %v1765
    %1798 = vmatprep.subr.mxu0 0.0
    %1799 = vmatpush1.msra.mxu0 %v1764
    %1800 = vmatprep.subr.mxu0 0.0
    %1801 = vmatpush1.msra.mxu0 %v1763
    %1802 = vmatprep.subr.mxu0 0.0
    %1803 = vmatpush1.msra.mxu0 %v1762
    %1804 = vmatprep.subr.mxu0 0.0
    %1805 = vmatpush1.msra.mxu0 %v1761
    %1806 = vmatprep.subr.mxu0 0.0
    %1807 = vmatpush1.msra.mxu0 %v1760
    %1808 = vmatprep.subr.mxu0 0.0
    %1809 = vmatpush1.msra.mxu0 %v1759
    %1810 = vmatprep.subr.mxu0 0.0
    %1811 = vmatpush1.msra.mxu0 %v1758
    %1812 = vmatprep.subr.mxu0 0.0
    %1813 = vmatpush1.msra.mxu0 %v1757
    %1814 = vmatprep.subr.mxu0 0.0
    %1815 = vmatpush2.msra.mxu0 0.0
    %1816 = vmatprep.subr.mxu0 0.0
    %1817 = vmatpush2.msra.mxu0 0.0
    %1818 = vmatprep.subr.mxu0 0.0
    %1819 = vmatpush2.msra.mxu0 0.0
    %1820 = vmatprep.subr.mxu0 0.0
    %1821 = vmatpush2.msra.mxu0 0.0
    %1822 = vmatprep.subr.mxu0 0.0
    %1823 = vmatpush2.msra.mxu0 0.0
    %1824 = vmatprep.subr.mxu0 0.0
    %1825 = vmatpush2.msra.mxu0 0.0
    %1826 = vmatprep.subr.mxu0 0.0
    %1827 = vmatpush2.msra.mxu0 0.0
    %1828 = vmatprep.subr.mxu0 0.0
    %1829 = vmatpush2.msra.mxu0 0.0
    %1830 = vmatprep.subr.mxu0 0.0
    %1831 = vmatpush2.msra.mxu0 0.0
    %1832 = vmatprep.subr.mxu0 0.0
    %1833 = vmatpush2.msra.mxu0 0.0
    %1834 = vmatprep.subr.mxu0 0.0
    %1835 = vmatpush2.msra.mxu0 0.0
    %1836 = vmatprep.subr.mxu0 0.0
    %1837 = vmatpush2.msra.mxu0 0.0
    %1838 = vmatprep.subr.mxu0 0.0
    %1839 = vmatpush2.msra.mxu0 0.0
    %1840 = vmatprep.subr.mxu0 0.0
    %1841 = vmatpush2.msra.mxu0 0.0
    %1842 = vmatprep.subr.mxu0 0.0
    %1843 = vmatpush2.msra.mxu0 0.0
    %1844 = vmatprep.subr.mxu0 0.0
    %1845 = vmatpush2.msra.mxu0 0.0
    %1846 = vmatprep.mubr.f32.mxu0 0.0
    %1847 = vmatmul.mubr.f32.gmra.mxu0 %v1780
    %v1848 = vpop.f32.mrf.mxu0
    %v1849 = vadd.f32 %v1776, %v1848
    %v1850 = vpop.f32.mrf.mxu0
    %1851 = vdwg.mxu0
    %1852 = vst [vmem:[#allocation5] sm:$0x3] %v1849
    // Predicated region
    $region14: #{style_classifier_forward.1} parent=1 // pred_check
      _
    $region15: #{style_classifier_forward.1} parent=1 // pred_check_branch
      %1854 = sbr.rel (0) target = $region17
    $region16: #{style_classifier_forward.1} parent=1 // pred_region
      %s1856 = ssub.s32 32, 32
      %1857 = vsyncadd [#allocation4], %s1856
      %s1859 = sshll.u32 [#allocation5], 4
      %s1860 = int_to_ptr.vmem [resolvable:$true] %s1859
      %1862 = dma.vmem_to_hbm [thread:$0]  %s1860, 32, %s2, [#allocation4]
    $region17: #{style_classifier_forward.1} parent=1 // pred_fallthru
      _
    // Predicated region
    $region18: #{style_classifier_forward.1} parent=1 // pred_check
      _
    $region19: #{style_classifier_forward.1} parent=1 // pred_check_branch
      %1864 = sbr.rel (0) target = $region21
    $region20: #{style_classifier_forward.1} parent=1 // pred_region
      %1865 = dma.done [#allocation4], 32
    $region21: #{style_classifier_forward.1} parent=1 // pred_fallthru
      _
    %1866 = vsyncpa [#allocation3], 1
    %1867 = vsyncpa [#allocation4], 1

</llo_original>
